<compile_context>
chip_gen: v5e
topology: v5e:2x2
jax: 0.10.0
libtpu: 0.0.40
codegen_flags: <defaults>
</compile_context>

<pallas_src>
import math

import jax
import jax.numpy as jnp
import numpy as np
from jax.experimental import pallas as pl
from jax.experimental.pallas import tpu as pltpu

DIMENSION = 3
FC1_DIMS = 1024
FC2_DIMS = 512
BOARD_FEATS = 13 * DIMENSION * DIMENSION          # 117


# ----------------------------- Pallas kernel -------------------------------
def net_kernel(board_ref, convpack_ref, bpack_ref,
               w_fc1_ref, w_fc2_ref, w_head_ref, out_ref):
    f32, bf16 = jnp.float32, jnp.bfloat16

    board = board_ref[...]                          # (TB, 128) bf16; cols 117:128 zero
    cp = convpack_ref[...]                          # (136, 8) bf16 packed conv weights
    w1 = cp[0:128, :]                               # folded im2col conv1: (128, 8)
    w2 = cp[128:136, 0:4]                           # block-diagonal conv2: (8, 4)

    bp = bpack_ref[...]                             # (8, 1024) f32 packed biases
    b_fc1 = bp[0:1, :]                              # (1, 1024)
    b_fc2 = bp[1:2, 0:FC2_DIMS]                     # (1, 512)
    b_head = bp[2:3, 0:128]                         # (1, 128)
    b_c1 = bp[3:4, 0:8]                             # (1, 8)   conv1 bias tiled per pixel
    b_c2 = bp[4:5, 0:4]                             # (1, 4)   conv2 bias tiled per pixel

    # conv1 (13->2, k=2, s=1); im2col folded into the weight; max_pool2d(k=1) == identity
    t = jnp.dot(board, w1, preferred_element_type=f32) + b_c1
    t = jnp.maximum(t, 0.0)                         # (TB, 8) = 4 pixels x 2 channels

    # conv2 (2->1, 1x1): columns == x[b, 0].flatten() in row-major pixel order
    flat = jnp.dot(t.astype(bf16), w2, preferred_element_type=f32) + b_c2
    flat = jnp.maximum(flat, 0.0)                   # (TB, 4)

    # fc1
    h1 = jnp.dot(flat.astype(bf16), w_fc1_ref[...], preferred_element_type=f32) + b_fc1
    h1 = jnp.maximum(h1, 0.0)                       # (TB, 1024)

    # fc2 (dominant GEMM): bf16 on the MXU, f32 accumulation
    h2 = jnp.dot(h1.astype(bf16), w_fc2_ref[...], preferred_element_type=f32) + b_fc2
    h2 = jnp.maximum(h2, 0.0)                       # (TB, 512)

    # fused policy(cols 0:9) + value(col 9) head, lane-dense 128-wide
    head = jnp.dot(h2.astype(bf16), w_head_ref[...], preferred_element_type=f32) + b_head
    col = jax.lax.broadcasted_iota(jnp.int32, head.shape, 1)
    head = jnp.where(col == 9, jnp.tanh(head), head)   # tanh only on the value column (EUP)
    out_ref[...] = head.astype(out_ref.dtype)       # (TB, 128) bf16


# ------------------------- parameter init / packing ------------------------
def init_params(key):
    """Deterministic PyTorch-style (uniform +/- 1/sqrt(fan_in)) init, PyTorch layouts."""
    def uniform(k, shape, fan_in):
        bound = 1.0 / math.sqrt(fan_in)
        return jax.random.uniform(k, shape, jnp.float32, -bound, bound)

    ks = jax.random.split(key, 12)
    p = {}
    p['conv1_w'] = uniform(ks[0], (2, 13, 2, 2), 13 * 2 * 2)
    p['conv1_b'] = uniform(ks[1], (2,), 13 * 2 * 2)
    p['conv2_w'] = uniform(ks[2], (1, 2, 1, 1), 2)
    p['conv2_b'] = uniform(ks[3], (1,), 2)
    p['fc1_w'] = uniform(ks[4], (FC1_DIMS, 4), 4)
    p['fc1_b'] = uniform(ks[5], (FC1_DIMS,), 4)
    p['fc2_w'] = uniform(ks[6], (FC2_DIMS, FC1_DIMS), FC1_DIMS)
    p['fc2_b'] = uniform(ks[7], (FC2_DIMS,), FC1_DIMS)
    p['value_w'] = uniform(ks[8], (1, FC2_DIMS), FC2_DIMS)
    p['value_b'] = uniform(ks[9], (1,), FC2_DIMS)
    p['policy_w'] = uniform(ks[10], (9, FC2_DIMS), FC2_DIMS)
    p['policy_b'] = uniform(ks[11], (9,), FC2_DIMS)
    return p


def prepare_params(params):
    """One-time (outside jit) repack into kernel layouts: im2col folded into conv1,
    block-diagonal conv2, bf16 weights, f32 bias pack, fused+padded head."""
    f32, bf16 = jnp.float32, jnp.bfloat16
    c1w = np.asarray(params['conv1_w'], np.float32)        # (2, 13, 2, 2)
    c2w = np.asarray(params['conv2_w'], np.float32)        # (1, 2, 1, 1)

    convpack = np.zeros((136, 8), np.float32)
    # rows 0:128 — conv1 with the im2col gather folded in:
    #   board_flat index = c*9 + (pi+di)*3 + (pj+dj);  output column = pixel*2 + out_ch
    for pi in range(2):
        for pj in range(2):
            pix = pi * 2 + pj
            for oc in range(2):
                for c in range(13):
                    for di in range(2):
                        for dj in range(2):
                            bidx = c * 9 + (pi + di) * 3 + (pj + dj)
                            convpack[bidx, pix * 2 + oc] = c1w[oc, c, di, dj]
    # rows 128:136 — block-diagonal conv2 (1x1): (B, 8) @ (8, 4) -> per-pixel conv2 out
    for pix in range(4):
        for ic in range(2):
            convpack[128 + pix * 2 + ic, pix] = c2w[0, ic, 0, 0]

    bpack = np.zeros((8, 1024), np.float32)
    bpack[0, :] = np.asarray(params['fc1_b'])
    bpack[1, :FC2_DIMS] = np.asarray(params['fc2_b'])
    bpack[2, :9] = np.asarray(params['policy_b'])
    bpack[2, 9] = float(np.asarray(params['value_b'])[0])
    bpack[3, :8] = np.tile(np.asarray(params['conv1_b']), 4)
    bpack[4, :4] = np.tile(np.asarray(params['conv2_b']), 4)

    w_head = np.zeros((FC2_DIMS, 128), np.float32)          # cols 0:9 policy, col 9 value
    w_head[:, :9] = np.asarray(params['policy_w']).T
    w_head[:, 9] = np.asarray(params['value_w'])[0]

    return dict(
        convpack=jnp.asarray(convpack, bf16),               # (136, 8)  bf16
        bpack=jnp.asarray(bpack, f32),                      # (8, 1024) f32 biases
        w_fc1=jnp.asarray(np.asarray(params['fc1_w']).T, bf16),     # (4, 1024)
        w_fc2=jnp.asarray(np.asarray(params['fc2_w']).T, bf16),     # (1024, 512)
        w_head=jnp.asarray(w_head, bf16),                   # (512, 128)
    )


# ------------------------------- glue (JAX) --------------------------------
def _round_up(n, m):
    return ((n + m - 1) // m) * m


def _tile_policy(B):
    """(padded batch, batch tile).  Single tile for small B (latency path); otherwise
    an even number of balanced <=256-row tiles so both v7x TensorCores stay busy while
    the ~0.35 us per-grid-step overhead stays amortized on v5e/v6e."""
    if B <= 128:
        Bp = max(8, _round_up(B, 8))
        return Bp, Bp
    steps = -(-B // 256)
    steps += steps % 2                                       # even step count for 2 TCs
    tb = _round_up(-(-B // steps), 8)
    return steps * tb, tb


@jax.jit
def network_forward_batched(xb, prepared):
    """xb: (B, 13, 3, 3).  Applies the module's forward to every board.
    Returns (policy (B, 9), value (B, 1)) in f32."""
    B = xb.shape[0]
    Bp, tb = _tile_policy(B)

    # Raw flattened board, bf16, padded to 128 lanes (the im2col gather lives inside
    # the conv1 weight now).  Note: bf16 is exact for integer-valued board planes.
    board = xb.reshape(B, BOARD_FEATS).astype(jnp.bfloat16)
    board = jnp.pad(board, ((0, Bp - B), (0, 128 - BOARD_FEATS)))

    head = pl.pallas_call(
        net_kernel,
        out_shape=jax.ShapeDtypeStruct((Bp, 128), jnp.bfloat16),
        grid=(Bp // tb,),
        in_specs=[
            pl.BlockSpec((tb, 128), lambda i: (i, 0)),       # per-tile activations
            pl.BlockSpec((136, 8), lambda i: (0, 0)),        # weights: constant index maps
            pl.BlockSpec((8, 1024), lambda i: (0, 0)),       #   -> VMEM-resident across steps
            pl.BlockSpec((4, 1024), lambda i: (0, 0)),
            pl.BlockSpec((1024, FC2_DIMS), lambda i: (0, 0)),
            pl.BlockSpec((FC2_DIMS, 128), lambda i: (0, 0)),
        ],
        out_specs=pl.BlockSpec((tb, 128), lambda i: (i, 0)),
        compiler_params=pltpu.CompilerParams(
            dimension_semantics=("parallel",)),
    )(board, prepared['convpack'], prepared['bpack'],
      prepared['w_fc1'], prepared['w_fc2'], prepared['w_head'])

    head = head[:B].astype(jnp.float32)
    return head[:, 0:9], head[:, 9:10]                       # tanh already applied in-kernel


def network_forward(x, prepared):
    """Module-faithful forward: x (1, 13, 3, 3) NCHW -> (policy (9,), value (1,)).
    (The torch forward uses x[0][0], i.e. only the first batch element.)"""
    # TODO(synk): for a real batch-1 serving loop, keep w_fc2/w_head VMEM-resident across
    # calls (P10 cross-call prefetch) instead of re-streaming ~1.1 MiB of weights per call.
    policy, value = network_forward_batched(x[0:1], prepared)
    return policy[0], value[0]


# ------------------------------ references ---------------------------------
def reference_forward(x, p):
    """Pure-JAX f32 mirror of the PyTorch forward."""
    dn = ('NCHW', 'OIHW', 'NCHW')
    y = jax.lax.conv_general_dilated(x[0:1], p['conv1_w'], (1, 1), 'VALID',
                                     dimension_numbers=dn) + p['conv1_b'].reshape(1, 2, 1, 1)
    y = jnp.maximum(y, 0.0)
    y = jax.lax.conv_general_dilated(y, p['conv2_w'], (1, 1), 'VALID',
                                     dimension_numbers=dn) + p['conv2_b'].reshape(1, 1, 1, 1)
    y = jnp.maximum(y, 0.0)
    flat = y[0, 0].reshape(-1)                              # (4,)
    h1 = jnp.maximum(flat @ p['fc1_w'].T + p['fc1_b'], 0.0)
    h2 = jnp.maximum(h1 @ p['fc2_w'].T + p['fc2_b'], 0.0)
    pol = h2 @ p['policy_w'].T + p['policy_b']
    val = jnp.tanh(h2 @ p['value_w'].T + p['value_b'])
    return pol, val


def reference_forward_bf16(x, p):
    """Same math but mirroring the kernel's bf16 quantization (bf16 inputs/weights,
    f32 accumulation, f32 biases, bf16 output)."""
    bf16, f32 = jnp.bfloat16, jnp.float32
    xb = x[0].astype(bf16)                                   # (13, 3, 3) — wrapper cast
    patches = []
    for i in range(2):
        for j in range(2):
            patches.append(xb[:, i:i + 2, j:j + 2].reshape(-1))
    patches = jnp.stack(patches)                             # (4, 52) row-major pixels
    w1 = p['conv1_w'].reshape(2, 52).astype(bf16)
    c1 = jnp.dot(patches, w1.T, preferred_element_type=f32) + p['conv1_b']
    c1 = jnp.maximum(c1, 0.0)                                # (4, 2)
    w2 = p['conv2_w'].reshape(1, 2).astype(bf16)
    c2 = jnp.dot(c1.astype(bf16), w2.T, preferred_element_type=f32) + p['conv2_b']
    flat = jnp.maximum(c2, 0.0).reshape(-1)                  # (4,)
    h1 = jnp.dot(flat.astype(bf16), p['fc1_w'].T.astype(bf16),
                 preferred_element_type=f32) + p['fc1_b']
    h1 = jnp.maximum(h1, 0.0)
    h2 = jnp.dot(h1.astype(bf16), p['fc2_w'].T.astype(bf16),
                 preferred_element_type=f32) + p['fc2_b']
    h2 = jnp.maximum(h2, 0.0)
    h2b = h2.astype(bf16)
    pol = jnp.dot(h2b, p['policy_w'].T.astype(bf16), preferred_element_type=f32) + p['policy_b']
    val = jnp.tanh(jnp.dot(h2b, p['value_w'].T.astype(bf16),
                           preferred_element_type=f32) + p['value_b'])
    return pol.astype(bf16).astype(f32), val.astype(bf16).astype(f32)


# ---------------------------------- main ------------------------------------
if __name__ == "__main__":
    key = jax.random.PRNGKey(0)
    k_param, k_x, k_xb, k_xm = jax.random.split(key, 4)
    params = init_params(k_param)
    prepared = prepare_params(params)            # one-time repack (outside jit)

    # --- module-faithful batch-1 forward, exactly like the nn.Module ---
    x = jax.random.normal(k_x, (1, 13, DIMENSION, DIMENSION), jnp.float32)
    policy, value = jax.block_until_ready(network_forward(x, prepared))

    # kernel vs bf16-quantized reference (same quantization): tight tolerance
    pol_q, val_q = reference_forward_bf16(x, params)
    np.testing.assert_allclose(np.asarray(policy), np.asarray(pol_q), rtol=1e-2, atol=1e-2)
    np.testing.assert_allclose(np.asarray(value), np.asarray(val_q), rtol=1e-2, atol=1e-2)

    # kernel vs full-f32 PyTorch-equivalent reference: tolerance reflects bf16
    # weight/activation quantization (f32 accumulation throughout).
    pol_ref, val_ref = reference_forward(x, params)
    np.testing.assert_allclose(np.asarray(policy), np.asarray(pol_ref), rtol=3e-2, atol=3e-2)
    np.testing.assert_allclose(np.asarray(value), np.asarray(val_ref), rtol=3e-2, atol=3e-2)

    # --- batched path, single tile (B=8 -> one grid step) ---
    xb = jax.random.normal(k_xb, (8, 13, DIMENSION, DIMENSION), jnp.float32)
    pol_b, val_b = jax.block_until_ready(network_forward_batched(xb, prepared))
    for b in range(xb.shape[0]):
        pr, vr = reference_forward(xb[b:b + 1], params)
        np.testing.assert_allclose(np.asarray(pol_b[b]), np.asarray(pr), rtol=3e-2, atol=3e-2)
        np.testing.assert_allclose(np.asarray(val_b[b]), np.asarray(vr), rtol=3e-2, atol=3e-2)

    # --- batched path, multi-tile grid (B=200 -> 2 balanced tiles of 104 rows) ---
    xm = jax.random.normal(k_xm, (200, 13, DIMENSION, DIMENSION), jnp.float32)
    pol_m, val_m = jax.block_until_ready(network_forward_batched(xm, prepared))
    for b in (0, 57, 199):
        pr, vr = reference_forward(xm[b:b + 1], params)
        np.testing.assert_allclose(np.asarray(pol_m[b]), np.asarray(pr), rtol=3e-2, atol=3e-2)
        np.testing.assert_allclose(np.asarray(val_m[b]), np.asarray(vr), rtol=3e-2, atol=3e-2)

    print("KERNEL_OK")
</pallas_src>

<mosaic_0001>
module attributes {stable_mosaic.version = 11 : i64} {
  func.func @net_kernel(%arg0: i32, %arg1: memref<8x128xbf16, #tpu.memory_space<vmem>>, %arg2: memref<136x8xbf16, #tpu.memory_space<vmem>>, %arg3: memref<8x1024xf32, #tpu.memory_space<vmem>>, %arg4: memref<4x1024xbf16, #tpu.memory_space<vmem>>, %arg5: memref<1024x512xbf16, #tpu.memory_space<vmem>>, %arg6: memref<512x128xbf16, #tpu.memory_space<vmem>>, %arg7: memref<8x128xbf16, #tpu.memory_space<vmem>>) attributes {dimension_semantics = [#tpu.dimension_semantics<parallel>], iteration_bounds = array<i64: 1>, scalar_prefetch = 0 : i64, scratch_operands = 0 : i64, tpu.core_type = #tpu.core_type<tc>, window_params = [{transform_indices = @transform_0, window_bounds = array<i64: 8, 128>}, {pipeline_mode = #tpu.pipeline_mode<synchronous>, transform_indices = @transform_1, window_bounds = array<i64: 136, 8>}, {pipeline_mode = #tpu.pipeline_mode<synchronous>, transform_indices = @transform_2, window_bounds = array<i64: 8, 1024>}, {pipeline_mode = #tpu.pipeline_mode<synchronous>, transform_indices = @transform_3, window_bounds = array<i64: 4, 1024>}, {pipeline_mode = #tpu.pipeline_mode<synchronous>, transform_indices = @transform_4, window_bounds = array<i64: 1024, 512>}, {pipeline_mode = #tpu.pipeline_mode<synchronous>, transform_indices = @transform_5, window_bounds = array<i64: 512, 128>}, {transform_indices = @transform_6, window_bounds = array<i64: 8, 128>}]} {
    %c0 = arith.constant 0 : index
    %c0_0 = arith.constant 0 : index
    %0 = vector.load %arg1[%c0, %c0_0] : memref<8x128xbf16, #tpu.memory_space<vmem>>, vector<8x128xbf16>
    %c0_1 = arith.constant 0 : index
    %c0_2 = arith.constant 0 : index
    %1 = vector.load %arg2[%c0_1, %c0_2] : memref<136x8xbf16, #tpu.memory_space<vmem>>, vector<136x8xbf16>
    %2 = vector.extract_strided_slice %1 {offsets = [0, 0], sizes = [128, 8], strides = [1, 1]} : vector<136x8xbf16> to vector<128x8xbf16>
    %3 = vector.extract_strided_slice %1 {offsets = [128, 0], sizes = [8, 4], strides = [1, 1]} : vector<136x8xbf16> to vector<8x4xbf16>
    %c0_3 = arith.constant 0 : index
    %c0_4 = arith.constant 0 : index
    %4 = vector.load %arg3[%c0_3, %c0_4] : memref<8x1024xf32, #tpu.memory_space<vmem>>, vector<8x1024xf32>
    %5 = vector.extract_strided_slice %4 {offsets = [0, 0], sizes = [1, 1024], strides = [1, 1]} : vector<8x1024xf32> to vector<1x1024xf32>
    %6 = vector.extract_strided_slice %4 {offsets = [1, 0], sizes = [1, 512], strides = [1, 1]} : vector<8x1024xf32> to vector<1x512xf32>
    %7 = vector.extract_strided_slice %4 {offsets = [2, 0], sizes = [1, 128], strides = [1, 1]} : vector<8x1024xf32> to vector<1x128xf32>
    %8 = vector.extract_strided_slice %4 {offsets = [3, 0], sizes = [1, 8], strides = [1, 1]} : vector<8x1024xf32> to vector<1x8xf32>
    %9 = vector.extract_strided_slice %4 {offsets = [4, 0], sizes = [1, 4], strides = [1, 1]} : vector<8x1024xf32> to vector<1x4xf32>
    %cst = arith.constant dense<0.000000e+00> : vector<8x8xf32>
    %10 = tpu.matmul %0, %2, %cst {dimension_numbers = #tpu.dot_dimension_numbers<[1], [0], [0], [1], [0, 0, 1, 1], [], []>} : vector<8x128xbf16>, vector<128x8xbf16>, vector<8x8xf32> -> vector<8x8xf32>
    %11 = vector.broadcast %8 : vector<1x8xf32> to vector<8x8xf32>
    %12 = arith.addf %10, %11 : vector<8x8xf32>
    %cst_5 = arith.constant 0.000000e+00 : f32
    %13 = vector.broadcast %cst_5 : f32 to vector<8x8xf32>
    %14 = arith.maximumf %12, %13 : vector<8x8xf32>
    %15 = arith.truncf %14 : vector<8x8xf32> to vector<8x8xbf16>
    %cst_6 = arith.constant dense<0.000000e+00> : vector<8x4xf32>
    %16 = tpu.matmul %15, %3, %cst_6 {dimension_numbers = #tpu.dot_dimension_numbers<[1], [0], [0], [1], [0, 0, 1, 1], [], []>} : vector<8x8xbf16>, vector<8x4xbf16>, vector<8x4xf32> -> vector<8x4xf32>
    %17 = vector.broadcast %9 : vector<1x4xf32> to vector<8x4xf32>
    %18 = arith.addf %16, %17 : vector<8x4xf32>
    %cst_7 = arith.constant 0.000000e+00 : f32
    %19 = vector.broadcast %cst_7 : f32 to vector<8x4xf32>
    %20 = arith.maximumf %18, %19 : vector<8x4xf32>
    %21 = arith.truncf %20 : vector<8x4xf32> to vector<8x4xbf16>
    %c0_8 = arith.constant 0 : index
    %c0_9 = arith.constant 0 : index
    %22 = vector.load %arg4[%c0_8, %c0_9] : memref<4x1024xbf16, #tpu.memory_space<vmem>>, vector<4x1024xbf16>
    %cst_10 = arith.constant dense<0.000000e+00> : vector<8x1024xf32>
    %23 = tpu.matmul %21, %22, %cst_10 {dimension_numbers = #tpu.dot_dimension_numbers<[1], [0], [0], [1], [0, 0, 1, 1], [], []>} : vector<8x4xbf16>, vector<4x1024xbf16>, vector<8x1024xf32> -> vector<8x1024xf32>
    %24 = vector.broadcast %5 : vector<1x1024xf32> to vector<8x1024xf32>
    %25 = arith.addf %23, %24 : vector<8x1024xf32>
    %cst_11 = arith.constant 0.000000e+00 : f32
    %26 = vector.broadcast %cst_11 : f32 to vector<8x1024xf32>
    %27 = arith.maximumf %25, %26 : vector<8x1024xf32>
    %28 = arith.truncf %27 : vector<8x1024xf32> to vector<8x1024xbf16>
    %c0_12 = arith.constant 0 : index
    %c0_13 = arith.constant 0 : index
    %29 = vector.load %arg5[%c0_12, %c0_13] : memref<1024x512xbf16, #tpu.memory_space<vmem>>, vector<1024x512xbf16>
    %cst_14 = arith.constant dense<0.000000e+00> : vector<8x512xf32>
    %30 = tpu.matmul %28, %29, %cst_14 {dimension_numbers = #tpu.dot_dimension_numbers<[1], [0], [0], [1], [0, 0, 1, 1], [], []>} : vector<8x1024xbf16>, vector<1024x512xbf16>, vector<8x512xf32> -> vector<8x512xf32>
    %31 = vector.broadcast %6 : vector<1x512xf32> to vector<8x512xf32>
    %32 = arith.addf %30, %31 : vector<8x512xf32>
    %cst_15 = arith.constant 0.000000e+00 : f32
    %33 = vector.broadcast %cst_15 : f32 to vector<8x512xf32>
    %34 = arith.maximumf %32, %33 : vector<8x512xf32>
    %35 = arith.truncf %34 : vector<8x512xf32> to vector<8x512xbf16>
    %c0_16 = arith.constant 0 : index
    %c0_17 = arith.constant 0 : index
    %36 = vector.load %arg6[%c0_16, %c0_17] : memref<512x128xbf16, #tpu.memory_space<vmem>>, vector<512x128xbf16>
    %cst_18 = arith.constant dense<0.000000e+00> : vector<8x128xf32>
    %37 = tpu.matmul %35, %36, %cst_18 {dimension_numbers = #tpu.dot_dimension_numbers<[1], [0], [0], [1], [0, 0, 1, 1], [], []>} : vector<8x512xbf16>, vector<512x128xbf16>, vector<8x128xf32> -> vector<8x128xf32>
    %38 = vector.broadcast %7 : vector<1x128xf32> to vector<8x128xf32>
    %39 = arith.addf %37, %38 : vector<8x128xf32>
    %40 = tpu.iota {dimensions = array<i32: 1>} : vector<8x128xi32>
    %c9_i32 = arith.constant 9 : i32
    %41 = vector.broadcast %c9_i32 : i32 to vector<8x128xi32>
    %42 = arith.cmpi eq, %40, %41 : vector<8x128xi32>
    %43 = math.tanh %39 : vector<8x128xf32>
    %44 = arith.select %42, %43, %39 : vector<8x128xi1>, vector<8x128xf32>
    %45 = arith.truncf %44 : vector<8x128xf32> to vector<8x128xbf16>
    %c0_19 = arith.constant 0 : index
    %c0_20 = arith.constant 0 : index
    %46 = vector.load %arg7[%c0_19, %c0_20] : memref<8x128xbf16, #tpu.memory_space<vmem>>, vector<8x128xbf16>
    tpu.vector_store %arg7[%c0_19, %c0_20], %45 {strides = array<i32>} : memref<8x128xbf16, #tpu.memory_space<vmem>>, vector<8x128xbf16>,
    return
  }
  func.func @transform_0(%arg0: i32) -> (i32, i32) {
    %c0_i32 = arith.constant 0 : i32
    %c0_i32_0 = arith.constant 0 : i32
    return %arg0, %c0_i32 : i32, i32
  }
  func.func @transform_1(%arg0: i32) -> (i32, i32) {
    %c0_i32 = arith.constant 0 : i32
    %c0_i32_0 = arith.constant 0 : i32
    %c0_i32_1 = arith.constant 0 : i32
    return %c0_i32, %c0_i32_0 : i32, i32
  }
  func.func @transform_2(%arg0: i32) -> (i32, i32) {
    %c0_i32 = arith.constant 0 : i32
    %c0_i32_0 = arith.constant 0 : i32
    %c0_i32_1 = arith.constant 0 : i32
    return %c0_i32, %c0_i32_0 : i32, i32
  }
  func.func @transform_3(%arg0: i32) -> (i32, i32) {
    %c0_i32 = arith.constant 0 : i32
    %c0_i32_0 = arith.constant 0 : i32
    %c0_i32_1 = arith.constant 0 : i32
    return %c0_i32, %c0_i32_0 : i32, i32
  }
  func.func @transform_4(%arg0: i32) -> (i32, i32) {
    %c0_i32 = arith.constant 0 : i32
    %c0_i32_0 = arith.constant 0 : i32
    %c0_i32_1 = arith.constant 0 : i32
    return %c0_i32, %c0_i32_0 : i32, i32
  }
  func.func @transform_5(%arg0: i32) -> (i32, i32) {
    %c0_i32 = arith.constant 0 : i32
    %c0_i32_0 = arith.constant 0 : i32
    %c0_i32_1 = arith.constant 0 : i32
    return %c0_i32, %c0_i32_0 : i32, i32
  }
  func.func @transform_6(%arg0: i32) -> (i32, i32) {
    %c0_i32 = arith.constant 0 : i32
    %c0_i32_0 = arith.constant 0 : i32
    return %arg0, %c0_i32 : i32, i32
  }
}

</mosaic_0001>

<llo_original>
// kernel: network_forward_batched.1
$region0: #{network_forward_batched.1}
  #allocation0 [shape = 'u32[]', space=smem, size = 0x4, offset = 0x4, fixed_abs, tag = 'smem constant byte address 0x4 - core index']
  #allocation1 [shape = 'u32[72,128]{1,0:T(1,128)}', space=vmem, size = 0x9000, scoped, tag = 'internal scratch']
  %s0 = inlined_call_operand.vmem [shape: bf16[8,128], index: 0, kind: input, shape index: {}]
  %s1 = inlined_call_operand.vmem [shape: bf16[136,8], index: 1, kind: input, shape index: {}]
  %s2 = inlined_call_operand.vmem [shape: f32[8,1024], index: 2, kind: input, shape index: {}]
  %s3 = inlined_call_operand.vmem [shape: bf16[4,1024], index: 3, kind: input, shape index: {}]
  %s4 = inlined_call_operand.hbm [shape: bf16[1024,512], index: 4, kind: input, shape index: {}]
  %s5 = inlined_call_operand.hbm [shape: bf16[512,128], index: 5, kind: input, shape index: {}]
  %s6 = inlined_call_operand.vmem [shape: bf16[8,128], index: 6, kind: output, shape index: {}]
  %s7 = sld [smem:[#allocation0]]
  $region42: #{network_forward_batched.1} parent=0
    _
  %s9 = ssub.s32 1, %s7
  %s10 = scalar_select 0, %s9, %s7
  $region1: #{network_forward_batched.1} parent=0
    #allocation2 [shape = 'u8[1048576]{0}', space=vmem, size = 0x100000, scoped, tag = 'input window, operand 4, single buffered']
    #allocation3 [shape = 's32[1]{0}', space=sflag, size = 0x4, scoped, tag = 'scoped memory for network_forward_batched.1']
    #allocation4 [shape = 'u8[131072]{0}', space=vmem, size = 0x20000, scoped, tag = 'input window, operand 5, single buffered']
    #allocation5 [shape = 's32[1]{0}', space=sflag, size = 0x4, scoped, tag = 'scoped memory for network_forward_batched.1']
    %11 = vsyncpa [#allocation3], 0
    %12 = vsyncpa [#allocation5], 0
    // Predicated region
    $region2: #{network_forward_batched.1} parent=1 // pred_check
      _
    $region3: #{network_forward_batched.1} parent=1 // pred_check_branch
      %14 = sbr.rel (0) target = $region5
    $region4: #{network_forward_batched.1} parent=1 // pred_region
      _
    $region5: #{network_forward_batched.1} parent=1 // pred_fallthru
      _
    // Predicated region
    $region6: #{network_forward_batched.1} parent=1 // pred_check
      _
    $region7: #{network_forward_batched.1} parent=1 // pred_check_branch
      %16 = sbr.rel (0) target = $region9
    $region8: #{network_forward_batched.1} parent=1 // pred_region
      _
    $region9: #{network_forward_batched.1} parent=1 // pred_fallthru
      _
    // Predicated region
    $region10: #{network_forward_batched.1} parent=1 // pred_check
      _
    $region11: #{network_forward_batched.1} parent=1 // pred_check_branch
      %18 = sbr.rel (0) target = $region13
    $region12: #{network_forward_batched.1} parent=1 // pred_region
      _
    $region13: #{network_forward_batched.1} parent=1 // pred_fallthru
      _
    // Predicated region
    $region14: #{network_forward_batched.1} parent=1 // pred_check
      _
    $region15: #{network_forward_batched.1} parent=1 // pred_check_branch
      %20 = sbr.rel (0) target = $region17
    $region16: #{network_forward_batched.1} parent=1 // pred_region
      _
    $region17: #{network_forward_batched.1} parent=1 // pred_fallthru
      _
    // Predicated region
    $region18: #{network_forward_batched.1} parent=1 // pred_check
      _
    $region19: #{network_forward_batched.1} parent=1 // pred_check_branch
      %22 = sbr.rel (0) target = $region21
    $region20: #{network_forward_batched.1} parent=1 // pred_region
      %24 = vsyncadd [#allocation3], 0
      %s25 = sshll.u32 %s4, 4
      %s26 = int_to_ptr.hbm [resolvable:$true] %s25
      %s27 = sshll.u32 [#allocation2], 4
      %s28 = int_to_ptr.vmem [resolvable:$true] %s27
      %33 = dma.hbm_to_vmem [thread:$0]  %s26, 32768, %s28, [#allocation3], 256, 256, 16
    $region21: #{network_forward_batched.1} parent=1 // pred_fallthru
      _
    // Predicated region
    $region22: #{network_forward_batched.1} parent=1 // pred_check
      _
    $region23: #{network_forward_batched.1} parent=1 // pred_check_branch
      %35 = sbr.rel (0) target = $region25
    $region24: #{network_forward_batched.1} parent=1 // pred_region
      %37 = vsyncadd [#allocation5], 0
      %s38 = sshll.u32 %s5, 4
      %s39 = int_to_ptr.hbm [resolvable:$true] %s38
      %s40 = sshll.u32 [#allocation4], 4
      %s41 = int_to_ptr.vmem [resolvable:$true] %s40
      %46 = dma.hbm_to_vmem [thread:$0]  %s39, 4096, %s41, [#allocation5], 64, 64, 4
    $region25: #{network_forward_batched.1} parent=1 // pred_fallthru
      _
    // Predicated region
    $region26: #{network_forward_batched.1} parent=1 // pred_check
      _
    $region27: #{network_forward_batched.1} parent=1 // pred_check_branch
      %48 = sbr.rel (0) target = $region29
    $region28: #{network_forward_batched.1} parent=1 // pred_region
      %50 = dma.done [#allocation3], 32768
    $region29: #{network_forward_batched.1} parent=1 // pred_fallthru
      _
    // Predicated region
    $region30: #{network_forward_batched.1} parent=1 // pred_check
      _
    $region31: #{network_forward_batched.1} parent=1 // pred_check_branch
      %52 = sbr.rel (0) target = $region33
    $region32: #{network_forward_batched.1} parent=1 // pred_region
      %54 = dma.done [#allocation5], 4096
    $region33: #{network_forward_batched.1} parent=1 // pred_fallthru
      _
    %v56 = vld [vmem:[%s0] sm:$0xf]
    %v57 = vld [vmem:[%s1] sm:$0xf]
    %v58 = vld [vmem:[%s1 + $0x4] sm:$0xf]
    %v59 = vld [vmem:[%s1 + $0x8] sm:$0xf]
    %v60 = vld [vmem:[%s1 + $0xc] sm:$0xf]
    %v61 = vld [vmem:[%s1 + $0x10] sm:$0xf]
    %v62 = vld [vmem:[%s1 + $0x14] sm:$0xf]
    %v63 = vld [vmem:[%s1 + $0x18] sm:$0xf]
    %v64 = vld [vmem:[%s1 + $0x1c] sm:$0xf]
    %v65 = vld [vmem:[%s1 + $0x20] sm:$0xf]
    %v66 = vld [vmem:[%s1 + $0x24] sm:$0xf]
    %v67 = vld [vmem:[%s1 + $0x28] sm:$0xf]
    %v68 = vld [vmem:[%s1 + $0x2c] sm:$0xf]
    %v69 = vld [vmem:[%s1 + $0x30] sm:$0xf]
    %v70 = vld [vmem:[%s1 + $0x34] sm:$0xf]
    %v71 = vld [vmem:[%s1 + $0x38] sm:$0xf]
    %v72 = vld [vmem:[%s1 + $0x3c] sm:$0xf]
    %v73 = vld [vmem:[%s1 + $0x40] sm:$0xf]
    %v74 = vld [vmem:[%s2] sm:$0xff]
    %v75 = vld [vmem:[%s2 + $0x8] sm:$0xff]
    %v76 = vld [vmem:[%s2 + $0x10] sm:$0xff]
    %v77 = vld [vmem:[%s2 + $0x18] sm:$0xff]
    %v78 = vld [vmem:[%s2 + $0x20] sm:$0xff]
    %v79 = vld [vmem:[%s2 + $0x28] sm:$0xff]
    %v80 = vld [vmem:[%s2 + $0x30] sm:$0xff]
    %v81 = vld [vmem:[%s2 + $0x38] sm:$0xff]
    %v82 = vperm.slane %v74, 3
    %v99 = vunpack.c.l.b16 %v57
    %v100 = vunpack.c.l.b16 %v58
    %v101 = vunpack.c.l.b16 %v59
    %v102 = vunpack.c.l.b16 %v60
    %v103 = vunpack.c.l.b16 %v61
    %v104 = vunpack.c.l.b16 %v62
    %v105 = vunpack.c.l.b16 %v63
    %v106 = vunpack.c.l.b16 %v64
    %v107 = vunpack.c.l.b16 %v65
    %v108 = vunpack.c.l.b16 %v66
    %v109 = vunpack.c.l.b16 %v67
    %v110 = vunpack.c.l.b16 %v68
    %v111 = vunpack.c.l.b16 %v69
    %v112 = vunpack.c.l.b16 %v70
    %v113 = vunpack.c.l.b16 %v71
    %v114 = vunpack.c.l.b16 %v72
    %v115 = vpack.c.b16 %v100, %v99
    %v116 = vpack.c.b16 %v102, %v101
    %v117 = vpack.c.b16 %v104, %v103
    %v118 = vpack.c.b16 %v106, %v105
    %v119 = vpack.c.b16 %v108, %v107
    %v120 = vpack.c.b16 %v110, %v109
    %v121 = vpack.c.b16 %v112, %v111
    %v122 = vpack.c.b16 %v114, %v113
    %131 = vmatpush.bf16.msra.mxu0 %v122
    %132 = vmatpush.bf16.msra.mxu0 %v121
    %133 = vmatpush.bf16.msra.mxu0 %v120
    %134 = vmatpush.bf16.msra.mxu0 %v119
    %135 = vmatpush.bf16.msra.mxu0 %v118
    %136 = vmatpush.bf16.msra.mxu0 %v117
    %137 = vmatpush.bf16.msra.mxu0 %v116
    %138 = vmatpush.bf16.msra.mxu0 %v115
    %139 = vmatmul.bf16.gmra.mxu0 %v56
    %v140 = vpop.f32.mrf.mxu0
    %v141 = vadd.f32 %v82, %v140
    %v142 = vpop.f32.mrf.mxu0
    %143 = vdwg.mxu0
    %v144 = vmax.f32 %v141, 0.0
    %v145 = vpack.c.bf16 %v144, %v144
    %v146 = vperm.slane %v74, 4
    %vm147 = vcmask 64512
    %v149 = vsel %vm147, %v145, 0
    %vm151 = vcmask 1043456
    %v153 = vsel %vm151, %v73, 0
    %155 = vmatpush.bf16.msra.mxu0 0
    %156 = vmatpush.bf16.msra.mxu0 0
    %157 = vmatpush.bf16.msra.mxu0 0
    %158 = vmatpush.bf16.msra.mxu0 0
    %159 = vmatpush.bf16.msra.mxu0 0
    %160 = vmatpush.bf16.msra.mxu0 0
    %161 = vmatpush.bf16.msra.mxu0 0
    %162 = vmatpush.bf16.msra.mxu0 %v153
    %163 = vmatmul.bf16.gmra.mxu0 %v149
    %v164 = vpop.f32.mrf.mxu0
    %v165 = vadd.f32 %v146, %v164
    %v166 = vpop.f32.mrf.mxu0
    %167 = vdwg.mxu0
    %v168 = vmax.f32 %v165, 0.0
    %v169 = vpack.c.bf16 %v168, %v168
    %v170 = vld [vmem:[%s3] sm:$0xff]
    %v171 = vld [vmem:[%s3 + $0x8] sm:$0xff]
    %v172 = vperm.slane %v74, 0
    %v173 = vperm.slane %v75, 0
    %v174 = vperm.slane %v76, 0
    %v175 = vperm.slane %v77, 0
    %v176 = vperm.slane %v78, 0
    %v177 = vperm.slane %v79, 0
    %v178 = vperm.slane %v80, 0
    %v179 = vperm.slane %v81, 0
    %181 = vst [vmem:[#allocation1] ss:$4 sm:$0xff] %v170
    %s183 = scalar_lea.vmem [#allocation1], 32
    %184 = vst [vmem:[%s183] ss:$4 sm:$0xff] %v171
    %v185 = vld.sshfl [vmem:[#allocation1] sm:$0xff pattern:$0x73625140]
    %v186 = vld.sshfl [vmem:[#allocation1 + $0x8] sm:$0xff pattern:$0x73625140]
    %v187 = vld.sshfl [vmem:[#allocation1 + $0x10] sm:$0xff pattern:$0x73625140]
    %v188 = vld.sshfl [vmem:[#allocation1 + $0x18] sm:$0xff pattern:$0x73625140]
    %v189 = vld.sshfl [vmem:[#allocation1 + $0x20] sm:$0xff pattern:$0x73625140]
    %v190 = vld.sshfl [vmem:[#allocation1 + $0x28] sm:$0xff pattern:$0x73625140]
    %v191 = vld.sshfl [vmem:[#allocation1 + $0x30] sm:$0xff pattern:$0x73625140]
    %v192 = vld.sshfl [vmem:[#allocation1 + $0x38] sm:$0xff pattern:$0x73625140]
    %vm193 = vcmask 31744
    %v195 = vsel %vm193, %v169, 0
    %vm197 = vcmask 1041408
    %v198 = vsel %vm197, %v185, 0
    %v200 = vsel %vm197, %v186, 0
    %v202 = vsel %vm197, %v187, 0
    %v204 = vsel %vm197, %v188, 0
    %v206 = vsel %vm197, %v189, 0
    %v208 = vsel %vm197, %v190, 0
    %v210 = vsel %vm197, %v191, 0
    %v212 = vsel %vm197, %v192, 0
    %214 = vmatpush.bf16.msra.mxu0 0
    %215 = vmatpush.bf16.msra.mxu0 0
    %216 = vmatpush.bf16.msra.mxu0 0
    %217 = vmatpush.bf16.msra.mxu0 0
    %218 = vmatpush.bf16.msra.mxu0 0
    %219 = vmatpush.bf16.msra.mxu0 0
    %220 = vmatpush.bf16.msra.mxu0 0
    %221 = vmatpush.bf16.msra.mxu0 %v198
    %222 = vmatmul.bf16.gmra.mxu0 %v195
    %v223 = vpop.f32.mrf.mxu0
    %v224 = vadd.f32 %v172, %v223
    %v225 = vpop.f32.mrf.mxu0
    %226 = vdwg.mxu0
    %227 = vmatpush.bf16.msra.mxu0 0
    %228 = vmatpush.bf16.msra.mxu0 0
    %229 = vmatpush.bf16.msra.mxu0 0
    %230 = vmatpush.bf16.msra.mxu0 0
    %231 = vmatpush.bf16.msra.mxu0 0
    %232 = vmatpush.bf16.msra.mxu0 0
    %233 = vmatpush.bf16.msra.mxu0 0
    %234 = vmatpush.bf16.msra.mxu0 %v200
    %235 = vmatmul.bf16.gmra.mxu0 %v195
    %v236 = vpop.f32.mrf.mxu0
    %v237 = vadd.f32 %v173, %v236
    %v238 = vpop.f32.mrf.mxu0
    %239 = vdwg.mxu0
    %240 = vmatpush.bf16.msra.mxu0 0
    %241 = vmatpush.bf16.msra.mxu0 0
    %242 = vmatpush.bf16.msra.mxu0 0
    %243 = vmatpush.bf16.msra.mxu0 0
    %244 = vmatpush.bf16.msra.mxu0 0
    %245 = vmatpush.bf16.msra.mxu0 0
    %246 = vmatpush.bf16.msra.mxu0 0
    %247 = vmatpush.bf16.msra.mxu0 %v202
    %248 = vmatmul.bf16.gmra.mxu0 %v195
    %v249 = vpop.f32.mrf.mxu0
    %v250 = vadd.f32 %v174, %v249
    %v251 = vpop.f32.mrf.mxu0
    %252 = vdwg.mxu0
    %253 = vmatpush.bf16.msra.mxu0 0
    %254 = vmatpush.bf16.msra.mxu0 0
    %255 = vmatpush.bf16.msra.mxu0 0
    %256 = vmatpush.bf16.msra.mxu0 0
    %257 = vmatpush.bf16.msra.mxu0 0
    %258 = vmatpush.bf16.msra.mxu0 0
    %259 = vmatpush.bf16.msra.mxu0 0
    %260 = vmatpush.bf16.msra.mxu0 %v204
    %261 = vmatmul.bf16.gmra.mxu0 %v195
    %v262 = vpop.f32.mrf.mxu0
    %v263 = vadd.f32 %v175, %v262
    %v264 = vpop.f32.mrf.mxu0
    %265 = vdwg.mxu0
    %266 = vmatpush.bf16.msra.mxu0 0
    %267 = vmatpush.bf16.msra.mxu0 0
    %268 = vmatpush.bf16.msra.mxu0 0
    %269 = vmatpush.bf16.msra.mxu0 0
    %270 = vmatpush.bf16.msra.mxu0 0
    %271 = vmatpush.bf16.msra.mxu0 0
    %272 = vmatpush.bf16.msra.mxu0 0
    %273 = vmatpush.bf16.msra.mxu0 %v206
    %274 = vmatmul.bf16.gmra.mxu0 %v195
    %v275 = vpop.f32.mrf.mxu0
    %v276 = vadd.f32 %v176, %v275
    %v277 = vpop.f32.mrf.mxu0
    %278 = vdwg.mxu0
    %279 = vmatpush.bf16.msra.mxu0 0
    %280 = vmatpush.bf16.msra.mxu0 0
    %281 = vmatpush.bf16.msra.mxu0 0
    %282 = vmatpush.bf16.msra.mxu0 0
    %283 = vmatpush.bf16.msra.mxu0 0
    %284 = vmatpush.bf16.msra.mxu0 0
    %285 = vmatpush.bf16.msra.mxu0 0
    %286 = vmatpush.bf16.msra.mxu0 %v208
    %287 = vmatmul.bf16.gmra.mxu0 %v195
    %v288 = vpop.f32.mrf.mxu0
    %v289 = vadd.f32 %v177, %v288
    %v290 = vpop.f32.mrf.mxu0
    %291 = vdwg.mxu0
    %292 = vmatpush.bf16.msra.mxu0 0
    %293 = vmatpush.bf16.msra.mxu0 0
    %294 = vmatpush.bf16.msra.mxu0 0
    %295 = vmatpush.bf16.msra.mxu0 0
    %296 = vmatpush.bf16.msra.mxu0 0
    %297 = vmatpush.bf16.msra.mxu0 0
    %298 = vmatpush.bf16.msra.mxu0 0
    %299 = vmatpush.bf16.msra.mxu0 %v210
    %300 = vmatmul.bf16.gmra.mxu0 %v195
    %v301 = vpop.f32.mrf.mxu0
    %v302 = vadd.f32 %v178, %v301
    %v303 = vpop.f32.mrf.mxu0
    %304 = vdwg.mxu0
    %305 = vmatpush.bf16.msra.mxu0 0
    %306 = vmatpush.bf16.msra.mxu0 0
    %307 = vmatpush.bf16.msra.mxu0 0
    %308 = vmatpush.bf16.msra.mxu0 0
    %309 = vmatpush.bf16.msra.mxu0 0
    %310 = vmatpush.bf16.msra.mxu0 0
    %311 = vmatpush.bf16.msra.mxu0 0
    %312 = vmatpush.bf16.msra.mxu0 %v212
    %313 = vmatmul.bf16.gmra.mxu0 %v195
    %v314 = vpop.f32.mrf.mxu0
    %v315 = vadd.f32 %v179, %v314
    %v316 = vpop.f32.mrf.mxu0
    %317 = vdwg.mxu0
    %v318 = vmax.f32 %v224, 0.0
    %v319 = vmax.f32 %v237, 0.0
    %v320 = vmax.f32 %v250, 0.0
    %v321 = vmax.f32 %v263, 0.0
    %v322 = vmax.f32 %v276, 0.0
    %v323 = vmax.f32 %v289, 0.0
    %v324 = vmax.f32 %v302, 0.0
    %v325 = vmax.f32 %v315, 0.0
    %v326 = vpack.c.bf16 %v318, %v318
    %v327 = vpack.c.bf16 %v319, %v319
    %v328 = vpack.c.bf16 %v320, %v320
    %v329 = vpack.c.bf16 %v321, %v321
    %v330 = vpack.c.bf16 %v322, %v322
    %v331 = vpack.c.bf16 %v323, %v323
    %v332 = vpack.c.bf16 %v324, %v324
    %v333 = vpack.c.bf16 %v325, %v325
    %v334 = vld [vmem:[#allocation2] sm:$0xff]
    %v335 = vld [vmem:[#allocation2 + $0x8] sm:$0xff]
    %v336 = vld [vmem:[#allocation2 + $0x10] sm:$0xff]
    %v337 = vld [vmem:[#allocation2 + $0x18] sm:$0xff]
    %v338 = vld [vmem:[#allocation2 + $0x20] sm:$0xff]
    %v339 = vld [vmem:[#allocation2 + $0x28] sm:$0xff]
    %v340 = vld [vmem:[#allocation2 + $0x30] sm:$0xff]
    %v341 = vld [vmem:[#allocation2 + $0x38] sm:$0xff]
    %v342 = vld [vmem:[#allocation2 + $0x40] sm:$0xff]
    %v343 = vld [vmem:[#allocation2 + $0x48] sm:$0xff]
    %v344 = vld [vmem:[#allocation2 + $0x50] sm:$0xff]
    %v345 = vld [vmem:[#allocation2 + $0x58] sm:$0xff]
    %v346 = vld [vmem:[#allocation2 + $0x60] sm:$0xff]
    %v347 = vld [vmem:[#allocation2 + $0x68] sm:$0xff]
    %v348 = vld [vmem:[#allocation2 + $0x70] sm:$0xff]
    %v349 = vld [vmem:[#allocation2 + $0x78] sm:$0xff]
    %v350 = vld [vmem:[#allocation2 + $0x80] sm:$0xff]
    %v351 = vld [vmem:[#allocation2 + $0x88] sm:$0xff]
    %v352 = vld [vmem:[#allocation2 + $0x90] sm:$0xff]
    %v353 = vld [vmem:[#allocation2 + $0x98] sm:$0xff]
    %v354 = vld [vmem:[#allocation2 + $0xa0] sm:$0xff]
    %v355 = vld [vmem:[#allocation2 + $0xa8] sm:$0xff]
    %v356 = vld [vmem:[#allocation2 + $0xb0] sm:$0xff]
    %v357 = vld [vmem:[#allocation2 + $0xb8] sm:$0xff]
    %v358 = vld [vmem:[#allocation2 + $0xc0] sm:$0xff]
    %v359 = vld [vmem:[#allocation2 + $0xc8] sm:$0xff]
    %v360 = vld [vmem:[#allocation2 + $0xd0] sm:$0xff]
    %v361 = vld [vmem:[#allocation2 + $0xd8] sm:$0xff]
    %v362 = vld [vmem:[#allocation2 + $0xe0] sm:$0xff]
    %v363 = vld [vmem:[#allocation2 + $0xe8] sm:$0xff]
    %v364 = vld [vmem:[#allocation2 + $0xf0] sm:$0xff]
    %v365 = vld [vmem:[#allocation2 + $0xf8] sm:$0xff]
    %v366 = vld [vmem:[#allocation2 + $0x100] sm:$0xff]
    %v367 = vld [vmem:[#allocation2 + $0x108] sm:$0xff]
    %v368 = vld [vmem:[#allocation2 + $0x110] sm:$0xff]
    %v369 = vld [vmem:[#allocation2 + $0x118] sm:$0xff]
    %v370 = vld [vmem:[#allocation2 + $0x120] sm:$0xff]
    %v371 = vld [vmem:[#allocation2 + $0x128] sm:$0xff]
    %v372 = vld [vmem:[#allocation2 + $0x130] sm:$0xff]
    %v373 = vld [vmem:[#allocation2 + $0x138] sm:$0xff]
    %v374 = vld [vmem:[#allocation2 + $0x140] sm:$0xff]
    %v375 = vld [vmem:[#allocation2 + $0x148] sm:$0xff]
    %v376 = vld [vmem:[#allocation2 + $0x150] sm:$0xff]
    %v377 = vld [vmem:[#allocation2 + $0x158] sm:$0xff]
    %v378 = vld [vmem:[#allocation2 + $0x160] sm:$0xff]
    %v379 = vld [vmem:[#allocation2 + $0x168] sm:$0xff]
    %v380 = vld [vmem:[#allocation2 + $0x170] sm:$0xff]
    %v381 = vld [vmem:[#allocation2 + $0x178] sm:$0xff]
    %v382 = vld [vmem:[#allocation2 + $0x180] sm:$0xff]
    %v383 = vld [vmem:[#allocation2 + $0x188] sm:$0xff]
    %v384 = vld [vmem:[#allocation2 + $0x190] sm:$0xff]
    %v385 = vld [vmem:[#allocation2 + $0x198] sm:$0xff]
    %v386 = vld [vmem:[#allocation2 + $0x1a0] sm:$0xff]
    %v387 = vld [vmem:[#allocation2 + $0x1a8] sm:$0xff]
    %v388 = vld [vmem:[#allocation2 + $0x1b0] sm:$0xff]
    %v389 = vld [vmem:[#allocation2 + $0x1b8] sm:$0xff]
    %v390 = vld [vmem:[#allocation2 + $0x1c0] sm:$0xff]
    %v391 = vld [vmem:[#allocation2 + $0x1c8] sm:$0xff]
    %v392 = vld [vmem:[#allocation2 + $0x1d0] sm:$0xff]
    %v393 = vld [vmem:[#allocation2 + $0x1d8] sm:$0xff]
    %v394 = vld [vmem:[#allocation2 + $0x1e0] sm:$0xff]
    %v395 = vld [vmem:[#allocation2 + $0x1e8] sm:$0xff]
    %v396 = vld [vmem:[#allocation2 + $0x1f0] sm:$0xff]
    %v397 = vld [vmem:[#allocation2 + $0x1f8] sm:$0xff]
    %v398 = vld [vmem:[#allocation2 + $0x200] sm:$0xff]
    %v399 = vld [vmem:[#allocation2 + $0x208] sm:$0xff]
    %v400 = vld [vmem:[#allocation2 + $0x210] sm:$0xff]
    %v401 = vld [vmem:[#allocation2 + $0x218] sm:$0xff]
    %v402 = vld [vmem:[#allocation2 + $0x220] sm:$0xff]
    %v403 = vld [vmem:[#allocation2 + $0x228] sm:$0xff]
    %v404 = vld [vmem:[#allocation2 + $0x230] sm:$0xff]
    %v405 = vld [vmem:[#allocation2 + $0x238] sm:$0xff]
    %v406 = vld [vmem:[#allocation2 + $0x240] sm:$0xff]
    %v407 = vld [vmem:[#allocation2 + $0x248] sm:$0xff]
    %v408 = vld [vmem:[#allocation2 + $0x250] sm:$0xff]
    %v409 = vld [vmem:[#allocation2 + $0x258] sm:$0xff]
    %v410 = vld [vmem:[#allocation2 + $0x260] sm:$0xff]
    %v411 = vld [vmem:[#allocation2 + $0x268] sm:$0xff]
    %v412 = vld [vmem:[#allocation2 + $0x270] sm:$0xff]
    %v413 = vld [vmem:[#allocation2 + $0x278] sm:$0xff]
    %v414 = vld [vmem:[#allocation2 + $0x280] sm:$0xff]
    %v415 = vld [vmem:[#allocation2 + $0x288] sm:$0xff]
    %v416 = vld [vmem:[#allocation2 + $0x290] sm:$0xff]
    %v417 = vld [vmem:[#allocation2 + $0x298] sm:$0xff]
    %v418 = vld [vmem:[#allocation2 + $0x2a0] sm:$0xff]
    %v419 = vld [vmem:[#allocation2 + $0x2a8] sm:$0xff]
    %v420 = vld [vmem:[#allocation2 + $0x2b0] sm:$0xff]
    %v421 = vld [vmem:[#allocation2 + $0x2b8] sm:$0xff]
    %v422 = vld [vmem:[#allocation2 + $0x2c0] sm:$0xff]
    %v423 = vld [vmem:[#allocation2 + $0x2c8] sm:$0xff]
    %v424 = vld [vmem:[#allocation2 + $0x2d0] sm:$0xff]
    %v425 = vld [vmem:[#allocation2 + $0x2d8] sm:$0xff]
    %v426 = vld [vmem:[#allocation2 + $0x2e0] sm:$0xff]
    %v427 = vld [vmem:[#allocation2 + $0x2e8] sm:$0xff]
    %v428 = vld [vmem:[#allocation2 + $0x2f0] sm:$0xff]
    %v429 = vld [vmem:[#allocation2 + $0x2f8] sm:$0xff]
    %v430 = vld [vmem:[#allocation2 + $0x300] sm:$0xff]
    %v431 = vld [vmem:[#allocation2 + $0x308] sm:$0xff]
    %v432 = vld [vmem:[#allocation2 + $0x310] sm:$0xff]
    %v433 = vld [vmem:[#allocation2 + $0x318] sm:$0xff]
    %v434 = vld [vmem:[#allocation2 + $0x320] sm:$0xff]
    %v435 = vld [vmem:[#allocation2 + $0x328] sm:$0xff]
    %v436 = vld [vmem:[#allocation2 + $0x330] sm:$0xff]
    %v437 = vld [vmem:[#allocation2 + $0x338] sm:$0xff]
    %v438 = vld [vmem:[#allocation2 + $0x340] sm:$0xff]
    %v439 = vld [vmem:[#allocation2 + $0x348] sm:$0xff]
    %v440 = vld [vmem:[#allocation2 + $0x350] sm:$0xff]
    %v441 = vld [vmem:[#allocation2 + $0x358] sm:$0xff]
    %v442 = vld [vmem:[#allocation2 + $0x360] sm:$0xff]
    %v443 = vld [vmem:[#allocation2 + $0x368] sm:$0xff]
    %v444 = vld [vmem:[#allocation2 + $0x370] sm:$0xff]
    %v445 = vld [vmem:[#allocation2 + $0x378] sm:$0xff]
    %v446 = vld [vmem:[#allocation2 + $0x380] sm:$0xff]
    %v447 = vld [vmem:[#allocation2 + $0x388] sm:$0xff]
    %v448 = vld [vmem:[#allocation2 + $0x390] sm:$0xff]
    %v449 = vld [vmem:[#allocation2 + $0x398] sm:$0xff]
    %v450 = vld [vmem:[#allocation2 + $0x3a0] sm:$0xff]
    %v451 = vld [vmem:[#allocation2 + $0x3a8] sm:$0xff]
    %v452 = vld [vmem:[#allocation2 + $0x3b0] sm:$0xff]
    %v453 = vld [vmem:[#allocation2 + $0x3b8] sm:$0xff]
    %v454 = vld [vmem:[#allocation2 + $0x3c0] sm:$0xff]
    %v455 = vld [vmem:[#allocation2 + $0x3c8] sm:$0xff]
    %v456 = vld [vmem:[#allocation2 + $0x3d0] sm:$0xff]
    %v457 = vld [vmem:[#allocation2 + $0x3d8] sm:$0xff]
    %v458 = vld [vmem:[#allocation2 + $0x3e0] sm:$0xff]
    %v459 = vld [vmem:[#allocation2 + $0x3e8] sm:$0xff]
    %v460 = vld [vmem:[#allocation2 + $0x3f0] sm:$0xff]
    %v461 = vld [vmem:[#allocation2 + $0x3f8] sm:$0xff]
    %v462 = vld [vmem:[#allocation2 + $0x400] sm:$0xff]
    %v463 = vld [vmem:[#allocation2 + $0x408] sm:$0xff]
    %v464 = vld [vmem:[#allocation2 + $0x410] sm:$0xff]
    %v465 = vld [vmem:[#allocation2 + $0x418] sm:$0xff]
    %v466 = vld [vmem:[#allocation2 + $0x420] sm:$0xff]
    %v467 = vld [vmem:[#allocation2 + $0x428] sm:$0xff]
    %v468 = vld [vmem:[#allocation2 + $0x430] sm:$0xff]
    %v469 = vld [vmem:[#allocation2 + $0x438] sm:$0xff]
    %v470 = vld [vmem:[#allocation2 + $0x440] sm:$0xff]
    %v471 = vld [vmem:[#allocation2 + $0x448] sm:$0xff]
    %v472 = vld [vmem:[#allocation2 + $0x450] sm:$0xff]
    %v473 = vld [vmem:[#allocation2 + $0x458] sm:$0xff]
    %v474 = vld [vmem:[#allocation2 + $0x460] sm:$0xff]
    %v475 = vld [vmem:[#allocation2 + $0x468] sm:$0xff]
    %v476 = vld [vmem:[#allocation2 + $0x470] sm:$0xff]
    %v477 = vld [vmem:[#allocation2 + $0x478] sm:$0xff]
    %v478 = vld [vmem:[#allocation2 + $0x480] sm:$0xff]
    %v479 = vld [vmem:[#allocation2 + $0x488] sm:$0xff]
    %v480 = vld [vmem:[#allocation2 + $0x490] sm:$0xff]
    %v481 = vld [vmem:[#allocation2 + $0x498] sm:$0xff]
    %v482 = vld [vmem:[#allocation2 + $0x4a0] sm:$0xff]
    %v483 = vld [vmem:[#allocation2 + $0x4a8] sm:$0xff]
    %v484 = vld [vmem:[#allocation2 + $0x4b0] sm:$0xff]
    %v485 = vld [vmem:[#allocation2 + $0x4b8] sm:$0xff]
    %v486 = vld [vmem:[#allocation2 + $0x4c0] sm:$0xff]
    %v487 = vld [vmem:[#allocation2 + $0x4c8] sm:$0xff]
    %v488 = vld [vmem:[#allocation2 + $0x4d0] sm:$0xff]
    %v489 = vld [vmem:[#allocation2 + $0x4d8] sm:$0xff]
    %v490 = vld [vmem:[#allocation2 + $0x4e0] sm:$0xff]
    %v491 = vld [vmem:[#allocation2 + $0x4e8] sm:$0xff]
    %v492 = vld [vmem:[#allocation2 + $0x4f0] sm:$0xff]
    %v493 = vld [vmem:[#allocation2 + $0x4f8] sm:$0xff]
    %v494 = vld [vmem:[#allocation2 + $0x500] sm:$0xff]
    %v495 = vld [vmem:[#allocation2 + $0x508] sm:$0xff]
    %v496 = vld [vmem:[#allocation2 + $0x510] sm:$0xff]
    %v497 = vld [vmem:[#allocation2 + $0x518] sm:$0xff]
    %v498 = vld [vmem:[#allocation2 + $0x520] sm:$0xff]
    %v499 = vld [vmem:[#allocation2 + $0x528] sm:$0xff]
    %v500 = vld [vmem:[#allocation2 + $0x530] sm:$0xff]
    %v501 = vld [vmem:[#allocation2 + $0x538] sm:$0xff]
    %v502 = vld [vmem:[#allocation2 + $0x540] sm:$0xff]
    %v503 = vld [vmem:[#allocation2 + $0x548] sm:$0xff]
    %v504 = vld [vmem:[#allocation2 + $0x550] sm:$0xff]
    %v505 = vld [vmem:[#allocation2 + $0x558] sm:$0xff]
    %v506 = vld [vmem:[#allocation2 + $0x560] sm:$0xff]
    %v507 = vld [vmem:[#allocation2 + $0x568] sm:$0xff]
    %v508 = vld [vmem:[#allocation2 + $0x570] sm:$0xff]
    %v509 = vld [vmem:[#allocation2 + $0x578] sm:$0xff]
    %v510 = vld [vmem:[#allocation2 + $0x580] sm:$0xff]
    %v511 = vld [vmem:[#allocation2 + $0x588] sm:$0xff]
    %v512 = vld [vmem:[#allocation2 + $0x590] sm:$0xff]
    %v513 = vld [vmem:[#allocation2 + $0x598] sm:$0xff]
    %v514 = vld [vmem:[#allocation2 + $0x5a0] sm:$0xff]
    %v515 = vld [vmem:[#allocation2 + $0x5a8] sm:$0xff]
    %v516 = vld [vmem:[#allocation2 + $0x5b0] sm:$0xff]
    %v517 = vld [vmem:[#allocation2 + $0x5b8] sm:$0xff]
    %v518 = vld [vmem:[#allocation2 + $0x5c0] sm:$0xff]
    %v519 = vld [vmem:[#allocation2 + $0x5c8] sm:$0xff]
    %v520 = vld [vmem:[#allocation2 + $0x5d0] sm:$0xff]
    %v521 = vld [vmem:[#allocation2 + $0x5d8] sm:$0xff]
    %v522 = vld [vmem:[#allocation2 + $0x5e0] sm:$0xff]
    %v523 = vld [vmem:[#allocation2 + $0x5e8] sm:$0xff]
    %v524 = vld [vmem:[#allocation2 + $0x5f0] sm:$0xff]
    %v525 = vld [vmem:[#allocation2 + $0x5f8] sm:$0xff]
    %v526 = vld [vmem:[#allocation2 + $0x600] sm:$0xff]
    %v527 = vld [vmem:[#allocation2 + $0x608] sm:$0xff]
    %v528 = vld [vmem:[#allocation2 + $0x610] sm:$0xff]
    %v529 = vld [vmem:[#allocation2 + $0x618] sm:$0xff]
    %v530 = vld [vmem:[#allocation2 + $0x620] sm:$0xff]
    %v531 = vld [vmem:[#allocation2 + $0x628] sm:$0xff]
    %v532 = vld [vmem:[#allocation2 + $0x630] sm:$0xff]
    %v533 = vld [vmem:[#allocation2 + $0x638] sm:$0xff]
    %v534 = vld [vmem:[#allocation2 + $0x640] sm:$0xff]
    %v535 = vld [vmem:[#allocation2 + $0x648] sm:$0xff]
    %v536 = vld [vmem:[#allocation2 + $0x650] sm:$0xff]
    %v537 = vld [vmem:[#allocation2 + $0x658] sm:$0xff]
    %v538 = vld [vmem:[#allocation2 + $0x660] sm:$0xff]
    %v539 = vld [vmem:[#allocation2 + $0x668] sm:$0xff]
    %v540 = vld [vmem:[#allocation2 + $0x670] sm:$0xff]
    %v541 = vld [vmem:[#allocation2 + $0x678] sm:$0xff]
    %v542 = vld [vmem:[#allocation2 + $0x680] sm:$0xff]
    %v543 = vld [vmem:[#allocation2 + $0x688] sm:$0xff]
    %v544 = vld [vmem:[#allocation2 + $0x690] sm:$0xff]
    %v545 = vld [vmem:[#allocation2 + $0x698] sm:$0xff]
    %v546 = vld [vmem:[#allocation2 + $0x6a0] sm:$0xff]
    %v547 = vld [vmem:[#allocation2 + $0x6a8] sm:$0xff]
    %v548 = vld [vmem:[#allocation2 + $0x6b0] sm:$0xff]
    %v549 = vld [vmem:[#allocation2 + $0x6b8] sm:$0xff]
    %v550 = vld [vmem:[#allocation2 + $0x6c0] sm:$0xff]
    %v551 = vld [vmem:[#allocation2 + $0x6c8] sm:$0xff]
    %v552 = vld [vmem:[#allocation2 + $0x6d0] sm:$0xff]
    %v553 = vld [vmem:[#allocation2 + $0x6d8] sm:$0xff]
    %v554 = vld [vmem:[#allocation2 + $0x6e0] sm:$0xff]
    %v555 = vld [vmem:[#allocation2 + $0x6e8] sm:$0xff]
    %v556 = vld [vmem:[#allocation2 + $0x6f0] sm:$0xff]
    %v557 = vld [vmem:[#allocation2 + $0x6f8] sm:$0xff]
    %v558 = vld [vmem:[#allocation2 + $0x700] sm:$0xff]
    %v559 = vld [vmem:[#allocation2 + $0x708] sm:$0xff]
    %v560 = vld [vmem:[#allocation2 + $0x710] sm:$0xff]
    %v561 = vld [vmem:[#allocation2 + $0x718] sm:$0xff]
    %v562 = vld [vmem:[#allocation2 + $0x720] sm:$0xff]
    %v563 = vld [vmem:[#allocation2 + $0x728] sm:$0xff]
    %v564 = vld [vmem:[#allocation2 + $0x730] sm:$0xff]
    %v565 = vld [vmem:[#allocation2 + $0x738] sm:$0xff]
    %v566 = vld [vmem:[#allocation2 + $0x740] sm:$0xff]
    %v567 = vld [vmem:[#allocation2 + $0x748] sm:$0xff]
    %v568 = vld [vmem:[#allocation2 + $0x750] sm:$0xff]
    %v569 = vld [vmem:[#allocation2 + $0x758] sm:$0xff]
    %v570 = vld [vmem:[#allocation2 + $0x760] sm:$0xff]
    %v571 = vld [vmem:[#allocation2 + $0x768] sm:$0xff]
    %v572 = vld [vmem:[#allocation2 + $0x770] sm:$0xff]
    %v573 = vld [vmem:[#allocation2 + $0x778] sm:$0xff]
    %v574 = vld [vmem:[#allocation2 + $0x780] sm:$0xff]
    %v575 = vld [vmem:[#allocation2 + $0x788] sm:$0xff]
    %v576 = vld [vmem:[#allocation2 + $0x790] sm:$0xff]
    %v577 = vld [vmem:[#allocation2 + $0x798] sm:$0xff]
    %v578 = vld [vmem:[#allocation2 + $0x7a0] sm:$0xff]
    %v579 = vld [vmem:[#allocation2 + $0x7a8] sm:$0xff]
    %v580 = vld [vmem:[#allocation2 + $0x7b0] sm:$0xff]
    %v581 = vld [vmem:[#allocation2 + $0x7b8] sm:$0xff]
    %v582 = vld [vmem:[#allocation2 + $0x7c0] sm:$0xff]
    %v583 = vld [vmem:[#allocation2 + $0x7c8] sm:$0xff]
    %v584 = vld [vmem:[#allocation2 + $0x7d0] sm:$0xff]
    %v585 = vld [vmem:[#allocation2 + $0x7d8] sm:$0xff]
    %v586 = vld [vmem:[#allocation2 + $0x7e0] sm:$0xff]
    %v587 = vld [vmem:[#allocation2 + $0x7e8] sm:$0xff]
    %v588 = vld [vmem:[#allocation2 + $0x7f0] sm:$0xff]
    %v589 = vld [vmem:[#allocation2 + $0x7f8] sm:$0xff]
    %v590 = vperm.slane %v74, 1
    %v591 = vperm.slane %v75, 1
    %v592 = vperm.slane %v76, 1
    %v593 = vperm.slane %v77, 1
    %v850 = vunpack.c.l.b16 %v334
    %v851 = vunpack.c.h.b16 %v334
    %v852 = vunpack.c.l.b16 %v335
    %v853 = vunpack.c.h.b16 %v335
    %v854 = vunpack.c.l.b16 %v336
    %v855 = vunpack.c.h.b16 %v336
    %v856 = vunpack.c.l.b16 %v337
    %v857 = vunpack.c.h.b16 %v337
    %v858 = vunpack.c.l.b16 %v338
    %v859 = vunpack.c.h.b16 %v338
    %v860 = vunpack.c.l.b16 %v339
    %v861 = vunpack.c.h.b16 %v339
    %v862 = vunpack.c.l.b16 %v340
    %v863 = vunpack.c.h.b16 %v340
    %v864 = vunpack.c.l.b16 %v341
    %v865 = vunpack.c.h.b16 %v341
    %v866 = vunpack.c.l.b16 %v342
    %v867 = vunpack.c.h.b16 %v342
    %v868 = vunpack.c.l.b16 %v343
    %v869 = vunpack.c.h.b16 %v343
    %v870 = vunpack.c.l.b16 %v344
    %v871 = vunpack.c.h.b16 %v344
    %v872 = vunpack.c.l.b16 %v345
    %v873 = vunpack.c.h.b16 %v345
    %v874 = vunpack.c.l.b16 %v346
    %v875 = vunpack.c.h.b16 %v346
    %v876 = vunpack.c.l.b16 %v347
    %v877 = vunpack.c.h.b16 %v347
    %v878 = vunpack.c.l.b16 %v348
    %v879 = vunpack.c.h.b16 %v348
    %v880 = vunpack.c.l.b16 %v349
    %v881 = vunpack.c.h.b16 %v349
    %v882 = vunpack.c.l.b16 %v350
    %v883 = vunpack.c.h.b16 %v350
    %v884 = vunpack.c.l.b16 %v351
    %v885 = vunpack.c.h.b16 %v351
    %v886 = vunpack.c.l.b16 %v352
    %v887 = vunpack.c.h.b16 %v352
    %v888 = vunpack.c.l.b16 %v353
    %v889 = vunpack.c.h.b16 %v353
    %v890 = vunpack.c.l.b16 %v354
    %v891 = vunpack.c.h.b16 %v354
    %v892 = vunpack.c.l.b16 %v355
    %v893 = vunpack.c.h.b16 %v355
    %v894 = vunpack.c.l.b16 %v356
    %v895 = vunpack.c.h.b16 %v356
    %v896 = vunpack.c.l.b16 %v357
    %v897 = vunpack.c.h.b16 %v357
    %v898 = vunpack.c.l.b16 %v358
    %v899 = vunpack.c.h.b16 %v358
    %v900 = vunpack.c.l.b16 %v359
    %v901 = vunpack.c.h.b16 %v359
    %v902 = vunpack.c.l.b16 %v360
    %v903 = vunpack.c.h.b16 %v360
    %v904 = vunpack.c.l.b16 %v361
    %v905 = vunpack.c.h.b16 %v361
    %v906 = vunpack.c.l.b16 %v362
    %v907 = vunpack.c.h.b16 %v362
    %v908 = vunpack.c.l.b16 %v363
    %v909 = vunpack.c.h.b16 %v363
    %v910 = vunpack.c.l.b16 %v364
    %v911 = vunpack.c.h.b16 %v364
    %v912 = vunpack.c.l.b16 %v365
    %v913 = vunpack.c.h.b16 %v365
    %v914 = vunpack.c.l.b16 %v366
    %v915 = vunpack.c.h.b16 %v366
    %v916 = vunpack.c.l.b16 %v367
    %v917 = vunpack.c.h.b16 %v367
    %v918 = vunpack.c.l.b16 %v368
    %v919 = vunpack.c.h.b16 %v368
    %v920 = vunpack.c.l.b16 %v369
    %v921 = vunpack.c.h.b16 %v369
    %v922 = vunpack.c.l.b16 %v370
    %v923 = vunpack.c.h.b16 %v370
    %v924 = vunpack.c.l.b16 %v371
    %v925 = vunpack.c.h.b16 %v371
    %v926 = vunpack.c.l.b16 %v372
    %v927 = vunpack.c.h.b16 %v372
    %v928 = vunpack.c.l.b16 %v373
    %v929 = vunpack.c.h.b16 %v373
    %v930 = vunpack.c.l.b16 %v374
    %v931 = vunpack.c.h.b16 %v374
    %v932 = vunpack.c.l.b16 %v375
    %v933 = vunpack.c.h.b16 %v375
    %v934 = vunpack.c.l.b16 %v376
    %v935 = vunpack.c.h.b16 %v376
    %v936 = vunpack.c.l.b16 %v377
    %v937 = vunpack.c.h.b16 %v377
    %v938 = vunpack.c.l.b16 %v378
    %v939 = vunpack.c.h.b16 %v378
    %v940 = vunpack.c.l.b16 %v379
    %v941 = vunpack.c.h.b16 %v379
    %v942 = vunpack.c.l.b16 %v380
    %v943 = vunpack.c.h.b16 %v380
    %v944 = vunpack.c.l.b16 %v381
    %v945 = vunpack.c.h.b16 %v381
    %v946 = vunpack.c.l.b16 %v382
    %v947 = vunpack.c.h.b16 %v382
    %v948 = vunpack.c.l.b16 %v383
    %v949 = vunpack.c.h.b16 %v383
    %v950 = vunpack.c.l.b16 %v384
    %v951 = vunpack.c.h.b16 %v384
    %v952 = vunpack.c.l.b16 %v385
    %v953 = vunpack.c.h.b16 %v385
    %v954 = vunpack.c.l.b16 %v386
    %v955 = vunpack.c.h.b16 %v386
    %v956 = vunpack.c.l.b16 %v387
    %v957 = vunpack.c.h.b16 %v387
    %v958 = vunpack.c.l.b16 %v388
    %v959 = vunpack.c.h.b16 %v388
    %v960 = vunpack.c.l.b16 %v389
    %v961 = vunpack.c.h.b16 %v389
    %v962 = vunpack.c.l.b16 %v390
    %v963 = vunpack.c.h.b16 %v390
    %v964 = vunpack.c.l.b16 %v391
    %v965 = vunpack.c.h.b16 %v391
    %v966 = vunpack.c.l.b16 %v392
    %v967 = vunpack.c.h.b16 %v392
    %v968 = vunpack.c.l.b16 %v393
    %v969 = vunpack.c.h.b16 %v393
    %v970 = vunpack.c.l.b16 %v394
    %v971 = vunpack.c.h.b16 %v394
    %v972 = vunpack.c.l.b16 %v395
    %v973 = vunpack.c.h.b16 %v395
    %v974 = vunpack.c.l.b16 %v396
    %v975 = vunpack.c.h.b16 %v396
    %v976 = vunpack.c.l.b16 %v397
    %v977 = vunpack.c.h.b16 %v397
    %v978 = vunpack.c.l.b16 %v398
    %v979 = vunpack.c.h.b16 %v398
    %v980 = vunpack.c.l.b16 %v399
    %v981 = vunpack.c.h.b16 %v399
    %v982 = vunpack.c.l.b16 %v400
    %v983 = vunpack.c.h.b16 %v400
    %v984 = vunpack.c.l.b16 %v401
    %v985 = vunpack.c.h.b16 %v401
    %v986 = vunpack.c.l.b16 %v402
    %v987 = vunpack.c.h.b16 %v402
    %v988 = vunpack.c.l.b16 %v403
    %v989 = vunpack.c.h.b16 %v403
    %v990 = vunpack.c.l.b16 %v404
    %v991 = vunpack.c.h.b16 %v404
    %v992 = vunpack.c.l.b16 %v405
    %v993 = vunpack.c.h.b16 %v405
    %v994 = vunpack.c.l.b16 %v406
    %v995 = vunpack.c.h.b16 %v406
    %v996 = vunpack.c.l.b16 %v407
    %v997 = vunpack.c.h.b16 %v407
    %v998 = vunpack.c.l.b16 %v408
    %v999 = vunpack.c.h.b16 %v408
    %v1000 = vunpack.c.l.b16 %v409
    %v1001 = vunpack.c.h.b16 %v409
    %v1002 = vunpack.c.l.b16 %v410
    %v1003 = vunpack.c.h.b16 %v410
    %v1004 = vunpack.c.l.b16 %v411
    %v1005 = vunpack.c.h.b16 %v411
    %v1006 = vunpack.c.l.b16 %v412
    %v1007 = vunpack.c.h.b16 %v412
    %v1008 = vunpack.c.l.b16 %v413
    %v1009 = vunpack.c.h.b16 %v413
    %v1010 = vunpack.c.l.b16 %v414
    %v1011 = vunpack.c.h.b16 %v414
    %v1012 = vunpack.c.l.b16 %v415
    %v1013 = vunpack.c.h.b16 %v415
    %v1014 = vunpack.c.l.b16 %v416
    %v1015 = vunpack.c.h.b16 %v416
    %v1016 = vunpack.c.l.b16 %v417
    %v1017 = vunpack.c.h.b16 %v417
    %v1018 = vunpack.c.l.b16 %v418
    %v1019 = vunpack.c.h.b16 %v418
    %v1020 = vunpack.c.l.b16 %v419
    %v1021 = vunpack.c.h.b16 %v419
    %v1022 = vunpack.c.l.b16 %v420
    %v1023 = vunpack.c.h.b16 %v420
    %v1024 = vunpack.c.l.b16 %v421
    %v1025 = vunpack.c.h.b16 %v421
    %v1026 = vunpack.c.l.b16 %v422
    %v1027 = vunpack.c.h.b16 %v422
    %v1028 = vunpack.c.l.b16 %v423
    %v1029 = vunpack.c.h.b16 %v423
    %v1030 = vunpack.c.l.b16 %v424
    %v1031 = vunpack.c.h.b16 %v424
    %v1032 = vunpack.c.l.b16 %v425
    %v1033 = vunpack.c.h.b16 %v425
    %v1034 = vunpack.c.l.b16 %v426
    %v1035 = vunpack.c.h.b16 %v426
    %v1036 = vunpack.c.l.b16 %v427
    %v1037 = vunpack.c.h.b16 %v427
    %v1038 = vunpack.c.l.b16 %v428
    %v1039 = vunpack.c.h.b16 %v428
    %v1040 = vunpack.c.l.b16 %v429
    %v1041 = vunpack.c.h.b16 %v429
    %v1042 = vunpack.c.l.b16 %v430
    %v1043 = vunpack.c.h.b16 %v430
    %v1044 = vunpack.c.l.b16 %v431
    %v1045 = vunpack.c.h.b16 %v431
    %v1046 = vunpack.c.l.b16 %v432
    %v1047 = vunpack.c.h.b16 %v432
    %v1048 = vunpack.c.l.b16 %v433
    %v1049 = vunpack.c.h.b16 %v433
    %v1050 = vunpack.c.l.b16 %v434
    %v1051 = vunpack.c.h.b16 %v434
    %v1052 = vunpack.c.l.b16 %v435
    %v1053 = vunpack.c.h.b16 %v435
    %v1054 = vunpack.c.l.b16 %v436
    %v1055 = vunpack.c.h.b16 %v436
    %v1056 = vunpack.c.l.b16 %v437
    %v1057 = vunpack.c.h.b16 %v437
    %v1058 = vunpack.c.l.b16 %v438
    %v1059 = vunpack.c.h.b16 %v438
    %v1060 = vunpack.c.l.b16 %v439
    %v1061 = vunpack.c.h.b16 %v439
    %v1062 = vunpack.c.l.b16 %v440
    %v1063 = vunpack.c.h.b16 %v440
    %v1064 = vunpack.c.l.b16 %v441
    %v1065 = vunpack.c.h.b16 %v441
    %v1066 = vunpack.c.l.b16 %v442
    %v1067 = vunpack.c.h.b16 %v442
    %v1068 = vunpack.c.l.b16 %v443
    %v1069 = vunpack.c.h.b16 %v443
    %v1070 = vunpack.c.l.b16 %v444
    %v1071 = vunpack.c.h.b16 %v444
    %v1072 = vunpack.c.l.b16 %v445
    %v1073 = vunpack.c.h.b16 %v445
    %v1074 = vunpack.c.l.b16 %v446
    %v1075 = vunpack.c.h.b16 %v446
    %v1076 = vunpack.c.l.b16 %v447
    %v1077 = vunpack.c.h.b16 %v447
    %v1078 = vunpack.c.l.b16 %v448
    %v1079 = vunpack.c.h.b16 %v448
    %v1080 = vunpack.c.l.b16 %v449
    %v1081 = vunpack.c.h.b16 %v449
    %v1082 = vunpack.c.l.b16 %v450
    %v1083 = vunpack.c.h.b16 %v450
    %v1084 = vunpack.c.l.b16 %v451
    %v1085 = vunpack.c.h.b16 %v451
    %v1086 = vunpack.c.l.b16 %v452
    %v1087 = vunpack.c.h.b16 %v452
    %v1088 = vunpack.c.l.b16 %v453
    %v1089 = vunpack.c.h.b16 %v453
    %v1090 = vunpack.c.l.b16 %v454
    %v1091 = vunpack.c.h.b16 %v454
    %v1092 = vunpack.c.l.b16 %v455
    %v1093 = vunpack.c.h.b16 %v455
    %v1094 = vunpack.c.l.b16 %v456
    %v1095 = vunpack.c.h.b16 %v456
    %v1096 = vunpack.c.l.b16 %v457
    %v1097 = vunpack.c.h.b16 %v457
    %v1098 = vunpack.c.l.b16 %v458
    %v1099 = vunpack.c.h.b16 %v458
    %v1100 = vunpack.c.l.b16 %v459
    %v1101 = vunpack.c.h.b16 %v459
    %v1102 = vunpack.c.l.b16 %v460
    %v1103 = vunpack.c.h.b16 %v460
    %v1104 = vunpack.c.l.b16 %v461
    %v1105 = vunpack.c.h.b16 %v461
    %v1106 = vunpack.c.l.b16 %v462
    %v1107 = vunpack.c.h.b16 %v462
    %v1108 = vunpack.c.l.b16 %v463
    %v1109 = vunpack.c.h.b16 %v463
    %v1110 = vunpack.c.l.b16 %v464
    %v1111 = vunpack.c.h.b16 %v464
    %v1112 = vunpack.c.l.b16 %v465
    %v1113 = vunpack.c.h.b16 %v465
    %v1114 = vunpack.c.l.b16 %v466
    %v1115 = vunpack.c.h.b16 %v466
    %v1116 = vunpack.c.l.b16 %v467
    %v1117 = vunpack.c.h.b16 %v467
    %v1118 = vunpack.c.l.b16 %v468
    %v1119 = vunpack.c.h.b16 %v468
    %v1120 = vunpack.c.l.b16 %v469
    %v1121 = vunpack.c.h.b16 %v469
    %v1122 = vunpack.c.l.b16 %v470
    %v1123 = vunpack.c.h.b16 %v470
    %v1124 = vunpack.c.l.b16 %v471
    %v1125 = vunpack.c.h.b16 %v471
    %v1126 = vunpack.c.l.b16 %v472
    %v1127 = vunpack.c.h.b16 %v472
    %v1128 = vunpack.c.l.b16 %v473
    %v1129 = vunpack.c.h.b16 %v473
    %v1130 = vunpack.c.l.b16 %v474
    %v1131 = vunpack.c.h.b16 %v474
    %v1132 = vunpack.c.l.b16 %v475
    %v1133 = vunpack.c.h.b16 %v475
    %v1134 = vunpack.c.l.b16 %v476
    %v1135 = vunpack.c.h.b16 %v476
    %v1136 = vunpack.c.l.b16 %v477
    %v1137 = vunpack.c.h.b16 %v477
    %v1138 = vunpack.c.l.b16 %v478
    %v1139 = vunpack.c.h.b16 %v478
    %v1140 = vunpack.c.l.b16 %v479
    %v1141 = vunpack.c.h.b16 %v479
    %v1142 = vunpack.c.l.b16 %v480
    %v1143 = vunpack.c.h.b16 %v480
    %v1144 = vunpack.c.l.b16 %v481
    %v1145 = vunpack.c.h.b16 %v481
    %v1146 = vunpack.c.l.b16 %v482
    %v1147 = vunpack.c.h.b16 %v482
    %v1148 = vunpack.c.l.b16 %v483
    %v1149 = vunpack.c.h.b16 %v483
    %v1150 = vunpack.c.l.b16 %v484
    %v1151 = vunpack.c.h.b16 %v484
    %v1152 = vunpack.c.l.b16 %v485
    %v1153 = vunpack.c.h.b16 %v485
    %v1154 = vunpack.c.l.b16 %v486
    %v1155 = vunpack.c.h.b16 %v486
    %v1156 = vunpack.c.l.b16 %v487
    %v1157 = vunpack.c.h.b16 %v487
    %v1158 = vunpack.c.l.b16 %v488
    %v1159 = vunpack.c.h.b16 %v488
    %v1160 = vunpack.c.l.b16 %v489
    %v1161 = vunpack.c.h.b16 %v489
    %v1162 = vunpack.c.l.b16 %v490
    %v1163 = vunpack.c.h.b16 %v490
    %v1164 = vunpack.c.l.b16 %v491
    %v1165 = vunpack.c.h.b16 %v491
    %v1166 = vunpack.c.l.b16 %v492
    %v1167 = vunpack.c.h.b16 %v492
    %v1168 = vunpack.c.l.b16 %v493
    %v1169 = vunpack.c.h.b16 %v493
    %v1170 = vunpack.c.l.b16 %v494
    %v1171 = vunpack.c.h.b16 %v494
    %v1172 = vunpack.c.l.b16 %v495
    %v1173 = vunpack.c.h.b16 %v495
    %v1174 = vunpack.c.l.b16 %v496
    %v1175 = vunpack.c.h.b16 %v496
    %v1176 = vunpack.c.l.b16 %v497
    %v1177 = vunpack.c.h.b16 %v497
    %v1178 = vunpack.c.l.b16 %v498
    %v1179 = vunpack.c.h.b16 %v498
    %v1180 = vunpack.c.l.b16 %v499
    %v1181 = vunpack.c.h.b16 %v499
    %v1182 = vunpack.c.l.b16 %v500
    %v1183 = vunpack.c.h.b16 %v500
    %v1184 = vunpack.c.l.b16 %v501
    %v1185 = vunpack.c.h.b16 %v501
    %v1186 = vunpack.c.l.b16 %v502
    %v1187 = vunpack.c.h.b16 %v502
    %v1188 = vunpack.c.l.b16 %v503
    %v1189 = vunpack.c.h.b16 %v503
    %v1190 = vunpack.c.l.b16 %v504
    %v1191 = vunpack.c.h.b16 %v504
    %v1192 = vunpack.c.l.b16 %v505
    %v1193 = vunpack.c.h.b16 %v505
    %v1194 = vunpack.c.l.b16 %v506
    %v1195 = vunpack.c.h.b16 %v506
    %v1196 = vunpack.c.l.b16 %v507
    %v1197 = vunpack.c.h.b16 %v507
    %v1198 = vunpack.c.l.b16 %v508
    %v1199 = vunpack.c.h.b16 %v508
    %v1200 = vunpack.c.l.b16 %v509
    %v1201 = vunpack.c.h.b16 %v509
    %v1202 = vunpack.c.l.b16 %v510
    %v1203 = vunpack.c.h.b16 %v510
    %v1204 = vunpack.c.l.b16 %v511
    %v1205 = vunpack.c.h.b16 %v511
    %v1206 = vunpack.c.l.b16 %v512
    %v1207 = vunpack.c.h.b16 %v512
    %v1208 = vunpack.c.l.b16 %v513
    %v1209 = vunpack.c.h.b16 %v513
    %v1210 = vunpack.c.l.b16 %v514
    %v1211 = vunpack.c.h.b16 %v514
    %v1212 = vunpack.c.l.b16 %v515
    %v1213 = vunpack.c.h.b16 %v515
    %v1214 = vunpack.c.l.b16 %v516
    %v1215 = vunpack.c.h.b16 %v516
    %v1216 = vunpack.c.l.b16 %v517
    %v1217 = vunpack.c.h.b16 %v517
    %v1218 = vunpack.c.l.b16 %v518
    %v1219 = vunpack.c.h.b16 %v518
    %v1220 = vunpack.c.l.b16 %v519
    %v1221 = vunpack.c.h.b16 %v519
    %v1222 = vunpack.c.l.b16 %v520
    %v1223 = vunpack.c.h.b16 %v520
    %v1224 = vunpack.c.l.b16 %v521
    %v1225 = vunpack.c.h.b16 %v521
    %v1226 = vunpack.c.l.b16 %v522
    %v1227 = vunpack.c.h.b16 %v522
    %v1228 = vunpack.c.l.b16 %v523
    %v1229 = vunpack.c.h.b16 %v523
    %v1230 = vunpack.c.l.b16 %v524
    %v1231 = vunpack.c.h.b16 %v524
    %v1232 = vunpack.c.l.b16 %v525
    %v1233 = vunpack.c.h.b16 %v525
    %v1234 = vunpack.c.l.b16 %v526
    %v1235 = vunpack.c.h.b16 %v526
    %v1236 = vunpack.c.l.b16 %v527
    %v1237 = vunpack.c.h.b16 %v527
    %v1238 = vunpack.c.l.b16 %v528
    %v1239 = vunpack.c.h.b16 %v528
    %v1240 = vunpack.c.l.b16 %v529
    %v1241 = vunpack.c.h.b16 %v529
    %v1242 = vunpack.c.l.b16 %v530
    %v1243 = vunpack.c.h.b16 %v530
    %v1244 = vunpack.c.l.b16 %v531
    %v1245 = vunpack.c.h.b16 %v531
    %v1246 = vunpack.c.l.b16 %v532
    %v1247 = vunpack.c.h.b16 %v532
    %v1248 = vunpack.c.l.b16 %v533
    %v1249 = vunpack.c.h.b16 %v533
    %v1250 = vunpack.c.l.b16 %v534
    %v1251 = vunpack.c.h.b16 %v534
    %v1252 = vunpack.c.l.b16 %v535
    %v1253 = vunpack.c.h.b16 %v535
    %v1254 = vunpack.c.l.b16 %v536
    %v1255 = vunpack.c.h.b16 %v536
    %v1256 = vunpack.c.l.b16 %v537
    %v1257 = vunpack.c.h.b16 %v537
    %v1258 = vunpack.c.l.b16 %v538
    %v1259 = vunpack.c.h.b16 %v538
    %v1260 = vunpack.c.l.b16 %v539
    %v1261 = vunpack.c.h.b16 %v539
    %v1262 = vunpack.c.l.b16 %v540
    %v1263 = vunpack.c.h.b16 %v540
    %v1264 = vunpack.c.l.b16 %v541
    %v1265 = vunpack.c.h.b16 %v541
    %v1266 = vunpack.c.l.b16 %v542
    %v1267 = vunpack.c.h.b16 %v542
    %v1268 = vunpack.c.l.b16 %v543
    %v1269 = vunpack.c.h.b16 %v543
    %v1270 = vunpack.c.l.b16 %v544
    %v1271 = vunpack.c.h.b16 %v544
    %v1272 = vunpack.c.l.b16 %v545
    %v1273 = vunpack.c.h.b16 %v545
    %v1274 = vunpack.c.l.b16 %v546
    %v1275 = vunpack.c.h.b16 %v546
    %v1276 = vunpack.c.l.b16 %v547
    %v1277 = vunpack.c.h.b16 %v547
    %v1278 = vunpack.c.l.b16 %v548
    %v1279 = vunpack.c.h.b16 %v548
    %v1280 = vunpack.c.l.b16 %v549
    %v1281 = vunpack.c.h.b16 %v549
    %v1282 = vunpack.c.l.b16 %v550
    %v1283 = vunpack.c.h.b16 %v550
    %v1284 = vunpack.c.l.b16 %v551
    %v1285 = vunpack.c.h.b16 %v551
    %v1286 = vunpack.c.l.b16 %v552
    %v1287 = vunpack.c.h.b16 %v552
    %v1288 = vunpack.c.l.b16 %v553
    %v1289 = vunpack.c.h.b16 %v553
    %v1290 = vunpack.c.l.b16 %v554
    %v1291 = vunpack.c.h.b16 %v554
    %v1292 = vunpack.c.l.b16 %v555
    %v1293 = vunpack.c.h.b16 %v555
    %v1294 = vunpack.c.l.b16 %v556
    %v1295 = vunpack.c.h.b16 %v556
    %v1296 = vunpack.c.l.b16 %v557
    %v1297 = vunpack.c.h.b16 %v557
    %v1298 = vunpack.c.l.b16 %v558
    %v1299 = vunpack.c.h.b16 %v558
    %v1300 = vunpack.c.l.b16 %v559
    %v1301 = vunpack.c.h.b16 %v559
    %v1302 = vunpack.c.l.b16 %v560
    %v1303 = vunpack.c.h.b16 %v560
    %v1304 = vunpack.c.l.b16 %v561
    %v1305 = vunpack.c.h.b16 %v561
    %v1306 = vunpack.c.l.b16 %v562
    %v1307 = vunpack.c.h.b16 %v562
    %v1308 = vunpack.c.l.b16 %v563
    %v1309 = vunpack.c.h.b16 %v563
    %v1310 = vunpack.c.l.b16 %v564
    %v1311 = vunpack.c.h.b16 %v564
    %v1312 = vunpack.c.l.b16 %v565
    %v1313 = vunpack.c.h.b16 %v565
    %v1314 = vunpack.c.l.b16 %v566
    %v1315 = vunpack.c.h.b16 %v566
    %v1316 = vunpack.c.l.b16 %v567
    %v1317 = vunpack.c.h.b16 %v567
    %v1318 = vunpack.c.l.b16 %v568
    %v1319 = vunpack.c.h.b16 %v568
    %v1320 = vunpack.c.l.b16 %v569
    %v1321 = vunpack.c.h.b16 %v569
    %v1322 = vunpack.c.l.b16 %v570
    %v1323 = vunpack.c.h.b16 %v570
    %v1324 = vunpack.c.l.b16 %v571
    %v1325 = vunpack.c.h.b16 %v571
    %v1326 = vunpack.c.l.b16 %v572
    %v1327 = vunpack.c.h.b16 %v572
    %v1328 = vunpack.c.l.b16 %v573
    %v1329 = vunpack.c.h.b16 %v573
    %v1330 = vunpack.c.l.b16 %v574
    %v1331 = vunpack.c.h.b16 %v574
    %v1332 = vunpack.c.l.b16 %v575
    %v1333 = vunpack.c.h.b16 %v575
    %v1334 = vunpack.c.l.b16 %v576
    %v1335 = vunpack.c.h.b16 %v576
    %v1336 = vunpack.c.l.b16 %v577
    %v1337 = vunpack.c.h.b16 %v577
    %v1338 = vunpack.c.l.b16 %v578
    %v1339 = vunpack.c.h.b16 %v578
    %v1340 = vunpack.c.l.b16 %v579
    %v1341 = vunpack.c.h.b16 %v579
    %v1342 = vunpack.c.l.b16 %v580
    %v1343 = vunpack.c.h.b16 %v580
    %v1344 = vunpack.c.l.b16 %v581
    %v1345 = vunpack.c.h.b16 %v581
    %v1346 = vunpack.c.l.b16 %v582
    %v1347 = vunpack.c.h.b16 %v582
    %v1348 = vunpack.c.l.b16 %v583
    %v1349 = vunpack.c.h.b16 %v583
    %v1350 = vunpack.c.l.b16 %v584
    %v1351 = vunpack.c.h.b16 %v584
    %v1352 = vunpack.c.l.b16 %v585
    %v1353 = vunpack.c.h.b16 %v585
    %v1354 = vunpack.c.l.b16 %v586
    %v1355 = vunpack.c.h.b16 %v586
    %v1356 = vunpack.c.l.b16 %v587
    %v1357 = vunpack.c.h.b16 %v587
    %v1358 = vunpack.c.l.b16 %v588
    %v1359 = vunpack.c.h.b16 %v588
    %v1360 = vunpack.c.l.b16 %v589
    %v1361 = vunpack.c.h.b16 %v589
    %v1362 = vpack.c.b16 %v854, %v850
    %v1363 = vpack.c.b16 %v855, %v851
    %v1364 = vpack.c.b16 %v856, %v852
    %v1365 = vpack.c.b16 %v857, %v853
    %v1366 = vpack.c.b16 %v862, %v858
    %v1367 = vpack.c.b16 %v863, %v859
    %v1368 = vpack.c.b16 %v864, %v860
    %v1369 = vpack.c.b16 %v865, %v861
    %v1370 = vpack.c.b16 %v870, %v866
    %v1371 = vpack.c.b16 %v871, %v867
    %v1372 = vpack.c.b16 %v872, %v868
    %v1373 = vpack.c.b16 %v873, %v869
    %v1374 = vpack.c.b16 %v878, %v874
    %v1375 = vpack.c.b16 %v879, %v875
    %v1376 = vpack.c.b16 %v880, %v876
    %v1377 = vpack.c.b16 %v881, %v877
    %v1378 = vpack.c.b16 %v886, %v882
    %v1379 = vpack.c.b16 %v887, %v883
    %v1380 = vpack.c.b16 %v888, %v884
    %v1381 = vpack.c.b16 %v889, %v885
    %v1382 = vpack.c.b16 %v894, %v890
    %v1383 = vpack.c.b16 %v895, %v891
    %v1384 = vpack.c.b16 %v896, %v892
    %v1385 = vpack.c.b16 %v897, %v893
    %v1386 = vpack.c.b16 %v902, %v898
    %v1387 = vpack.c.b16 %v903, %v899
    %v1388 = vpack.c.b16 %v904, %v900
    %v1389 = vpack.c.b16 %v905, %v901
    %v1390 = vpack.c.b16 %v910, %v906
    %v1391 = vpack.c.b16 %v911, %v907
    %v1392 = vpack.c.b16 %v912, %v908
    %v1393 = vpack.c.b16 %v913, %v909
    %v1394 = vpack.c.b16 %v918, %v914
    %v1395 = vpack.c.b16 %v919, %v915
    %v1396 = vpack.c.b16 %v920, %v916
    %v1397 = vpack.c.b16 %v921, %v917
    %v1398 = vpack.c.b16 %v926, %v922
    %v1399 = vpack.c.b16 %v927, %v923
    %v1400 = vpack.c.b16 %v928, %v924
    %v1401 = vpack.c.b16 %v929, %v925
    %v1402 = vpack.c.b16 %v934, %v930
    %v1403 = vpack.c.b16 %v935, %v931
    %v1404 = vpack.c.b16 %v936, %v932
    %v1405 = vpack.c.b16 %v937, %v933
    %v1406 = vpack.c.b16 %v942, %v938
    %v1407 = vpack.c.b16 %v943, %v939
    %v1408 = vpack.c.b16 %v944, %v940
    %v1409 = vpack.c.b16 %v945, %v941
    %v1410 = vpack.c.b16 %v950, %v946
    %v1411 = vpack.c.b16 %v951, %v947
    %v1412 = vpack.c.b16 %v952, %v948
    %v1413 = vpack.c.b16 %v953, %v949
    %v1414 = vpack.c.b16 %v958, %v954
    %v1415 = vpack.c.b16 %v959, %v955
    %v1416 = vpack.c.b16 %v960, %v956
    %v1417 = vpack.c.b16 %v961, %v957
    %v1418 = vpack.c.b16 %v966, %v962
    %v1419 = vpack.c.b16 %v967, %v963
    %v1420 = vpack.c.b16 %v968, %v964
    %v1421 = vpack.c.b16 %v969, %v965
    %v1422 = vpack.c.b16 %v974, %v970
    %v1423 = vpack.c.b16 %v975, %v971
    %v1424 = vpack.c.b16 %v976, %v972
    %v1425 = vpack.c.b16 %v977, %v973
    %v1426 = vpack.c.b16 %v982, %v978
    %v1427 = vpack.c.b16 %v983, %v979
    %v1428 = vpack.c.b16 %v984, %v980
    %v1429 = vpack.c.b16 %v985, %v981
    %v1430 = vpack.c.b16 %v990, %v986
    %v1431 = vpack.c.b16 %v991, %v987
    %v1432 = vpack.c.b16 %v992, %v988
    %v1433 = vpack.c.b16 %v993, %v989
    %v1434 = vpack.c.b16 %v998, %v994
    %v1435 = vpack.c.b16 %v999, %v995
    %v1436 = vpack.c.b16 %v1000, %v996
    %v1437 = vpack.c.b16 %v1001, %v997
    %v1438 = vpack.c.b16 %v1006, %v1002
    %v1439 = vpack.c.b16 %v1007, %v1003
    %v1440 = vpack.c.b16 %v1008, %v1004
    %v1441 = vpack.c.b16 %v1009, %v1005
    %v1442 = vpack.c.b16 %v1014, %v1010
    %v1443 = vpack.c.b16 %v1015, %v1011
    %v1444 = vpack.c.b16 %v1016, %v1012
    %v1445 = vpack.c.b16 %v1017, %v1013
    %v1446 = vpack.c.b16 %v1022, %v1018
    %v1447 = vpack.c.b16 %v1023, %v1019
    %v1448 = vpack.c.b16 %v1024, %v1020
    %v1449 = vpack.c.b16 %v1025, %v1021
    %v1450 = vpack.c.b16 %v1030, %v1026
    %v1451 = vpack.c.b16 %v1031, %v1027
    %v1452 = vpack.c.b16 %v1032, %v1028
    %v1453 = vpack.c.b16 %v1033, %v1029
    %v1454 = vpack.c.b16 %v1038, %v1034
    %v1455 = vpack.c.b16 %v1039, %v1035
    %v1456 = vpack.c.b16 %v1040, %v1036
    %v1457 = vpack.c.b16 %v1041, %v1037
    %v1458 = vpack.c.b16 %v1046, %v1042
    %v1459 = vpack.c.b16 %v1047, %v1043
    %v1460 = vpack.c.b16 %v1048, %v1044
    %v1461 = vpack.c.b16 %v1049, %v1045
    %v1462 = vpack.c.b16 %v1054, %v1050
    %v1463 = vpack.c.b16 %v1055, %v1051
    %v1464 = vpack.c.b16 %v1056, %v1052
    %v1465 = vpack.c.b16 %v1057, %v1053
    %v1466 = vpack.c.b16 %v1062, %v1058
    %v1467 = vpack.c.b16 %v1063, %v1059
    %v1468 = vpack.c.b16 %v1064, %v1060
    %v1469 = vpack.c.b16 %v1065, %v1061
    %v1470 = vpack.c.b16 %v1070, %v1066
    %v1471 = vpack.c.b16 %v1071, %v1067
    %v1472 = vpack.c.b16 %v1072, %v1068
    %v1473 = vpack.c.b16 %v1073, %v1069
    %v1474 = vpack.c.b16 %v1078, %v1074
    %v1475 = vpack.c.b16 %v1079, %v1075
    %v1476 = vpack.c.b16 %v1080, %v1076
    %v1477 = vpack.c.b16 %v1081, %v1077
    %v1478 = vpack.c.b16 %v1086, %v1082
    %v1479 = vpack.c.b16 %v1087, %v1083
    %v1480 = vpack.c.b16 %v1088, %v1084
    %v1481 = vpack.c.b16 %v1089, %v1085
    %v1482 = vpack.c.b16 %v1094, %v1090
    %v1483 = vpack.c.b16 %v1095, %v1091
    %v1484 = vpack.c.b16 %v1096, %v1092
    %v1485 = vpack.c.b16 %v1097, %v1093
    %v1486 = vpack.c.b16 %v1102, %v1098
    %v1487 = vpack.c.b16 %v1103, %v1099
    %v1488 = vpack.c.b16 %v1104, %v1100
    %v1489 = vpack.c.b16 %v1105, %v1101
    %v1490 = vpack.c.b16 %v1110, %v1106
    %v1491 = vpack.c.b16 %v1111, %v1107
    %v1492 = vpack.c.b16 %v1112, %v1108
    %v1493 = vpack.c.b16 %v1113, %v1109
    %v1494 = vpack.c.b16 %v1118, %v1114
    %v1495 = vpack.c.b16 %v1119, %v1115
    %v1496 = vpack.c.b16 %v1120, %v1116
    %v1497 = vpack.c.b16 %v1121, %v1117
    %v1498 = vpack.c.b16 %v1126, %v1122
    %v1499 = vpack.c.b16 %v1127, %v1123
    %v1500 = vpack.c.b16 %v1128, %v1124
    %v1501 = vpack.c.b16 %v1129, %v1125
    %v1502 = vpack.c.b16 %v1134, %v1130
    %v1503 = vpack.c.b16 %v1135, %v1131
    %v1504 = vpack.c.b16 %v1136, %v1132
    %v1505 = vpack.c.b16 %v1137, %v1133
    %v1506 = vpack.c.b16 %v1142, %v1138
    %v1507 = vpack.c.b16 %v1143, %v1139
    %v1508 = vpack.c.b16 %v1144, %v1140
    %v1509 = vpack.c.b16 %v1145, %v1141
    %v1510 = vpack.c.b16 %v1150, %v1146
    %v1511 = vpack.c.b16 %v1151, %v1147
    %v1512 = vpack.c.b16 %v1152, %v1148
    %v1513 = vpack.c.b16 %v1153, %v1149
    %v1514 = vpack.c.b16 %v1158, %v1154
    %v1515 = vpack.c.b16 %v1159, %v1155
    %v1516 = vpack.c.b16 %v1160, %v1156
    %v1517 = vpack.c.b16 %v1161, %v1157
    %v1518 = vpack.c.b16 %v1166, %v1162
    %v1519 = vpack.c.b16 %v1167, %v1163
    %v1520 = vpack.c.b16 %v1168, %v1164
    %v1521 = vpack.c.b16 %v1169, %v1165
    %v1522 = vpack.c.b16 %v1174, %v1170
    %v1523 = vpack.c.b16 %v1175, %v1171
    %v1524 = vpack.c.b16 %v1176, %v1172
    %v1525 = vpack.c.b16 %v1177, %v1173
    %v1526 = vpack.c.b16 %v1182, %v1178
    %v1527 = vpack.c.b16 %v1183, %v1179
    %v1528 = vpack.c.b16 %v1184, %v1180
    %v1529 = vpack.c.b16 %v1185, %v1181
    %v1530 = vpack.c.b16 %v1190, %v1186
    %v1531 = vpack.c.b16 %v1191, %v1187
    %v1532 = vpack.c.b16 %v1192, %v1188
    %v1533 = vpack.c.b16 %v1193, %v1189
    %v1534 = vpack.c.b16 %v1198, %v1194
    %v1535 = vpack.c.b16 %v1199, %v1195
    %v1536 = vpack.c.b16 %v1200, %v1196
    %v1537 = vpack.c.b16 %v1201, %v1197
    %v1538 = vpack.c.b16 %v1206, %v1202
    %v1539 = vpack.c.b16 %v1207, %v1203
    %v1540 = vpack.c.b16 %v1208, %v1204
    %v1541 = vpack.c.b16 %v1209, %v1205
    %v1542 = vpack.c.b16 %v1214, %v1210
    %v1543 = vpack.c.b16 %v1215, %v1211
    %v1544 = vpack.c.b16 %v1216, %v1212
    %v1545 = vpack.c.b16 %v1217, %v1213
    %v1546 = vpack.c.b16 %v1222, %v1218
    %v1547 = vpack.c.b16 %v1223, %v1219
    %v1548 = vpack.c.b16 %v1224, %v1220
    %v1549 = vpack.c.b16 %v1225, %v1221
    %v1550 = vpack.c.b16 %v1230, %v1226
    %v1551 = vpack.c.b16 %v1231, %v1227
    %v1552 = vpack.c.b16 %v1232, %v1228
    %v1553 = vpack.c.b16 %v1233, %v1229
    %v1554 = vpack.c.b16 %v1238, %v1234
    %v1555 = vpack.c.b16 %v1239, %v1235
    %v1556 = vpack.c.b16 %v1240, %v1236
    %v1557 = vpack.c.b16 %v1241, %v1237
    %v1558 = vpack.c.b16 %v1246, %v1242
    %v1559 = vpack.c.b16 %v1247, %v1243
    %v1560 = vpack.c.b16 %v1248, %v1244
    %v1561 = vpack.c.b16 %v1249, %v1245
    %v1562 = vpack.c.b16 %v1254, %v1250
    %v1563 = vpack.c.b16 %v1255, %v1251
    %v1564 = vpack.c.b16 %v1256, %v1252
    %v1565 = vpack.c.b16 %v1257, %v1253
    %v1566 = vpack.c.b16 %v1262, %v1258
    %v1567 = vpack.c.b16 %v1263, %v1259
    %v1568 = vpack.c.b16 %v1264, %v1260
    %v1569 = vpack.c.b16 %v1265, %v1261
    %v1570 = vpack.c.b16 %v1270, %v1266
    %v1571 = vpack.c.b16 %v1271, %v1267
    %v1572 = vpack.c.b16 %v1272, %v1268
    %v1573 = vpack.c.b16 %v1273, %v1269
    %v1574 = vpack.c.b16 %v1278, %v1274
    %v1575 = vpack.c.b16 %v1279, %v1275
    %v1576 = vpack.c.b16 %v1280, %v1276
    %v1577 = vpack.c.b16 %v1281, %v1277
    %v1578 = vpack.c.b16 %v1286, %v1282
    %v1579 = vpack.c.b16 %v1287, %v1283
    %v1580 = vpack.c.b16 %v1288, %v1284
    %v1581 = vpack.c.b16 %v1289, %v1285
    %v1582 = vpack.c.b16 %v1294, %v1290
    %v1583 = vpack.c.b16 %v1295, %v1291
    %v1584 = vpack.c.b16 %v1296, %v1292
    %v1585 = vpack.c.b16 %v1297, %v1293
    %v1586 = vpack.c.b16 %v1302, %v1298
    %v1587 = vpack.c.b16 %v1303, %v1299
    %v1588 = vpack.c.b16 %v1304, %v1300
    %v1589 = vpack.c.b16 %v1305, %v1301
    %v1590 = vpack.c.b16 %v1310, %v1306
    %v1591 = vpack.c.b16 %v1311, %v1307
    %v1592 = vpack.c.b16 %v1312, %v1308
    %v1593 = vpack.c.b16 %v1313, %v1309
    %v1594 = vpack.c.b16 %v1318, %v1314
    %v1595 = vpack.c.b16 %v1319, %v1315
    %v1596 = vpack.c.b16 %v1320, %v1316
    %v1597 = vpack.c.b16 %v1321, %v1317
    %v1598 = vpack.c.b16 %v1326, %v1322
    %v1599 = vpack.c.b16 %v1327, %v1323
    %v1600 = vpack.c.b16 %v1328, %v1324
    %v1601 = vpack.c.b16 %v1329, %v1325
    %v1602 = vpack.c.b16 %v1334, %v1330
    %v1603 = vpack.c.b16 %v1335, %v1331
    %v1604 = vpack.c.b16 %v1336, %v1332
    %v1605 = vpack.c.b16 %v1337, %v1333
    %v1606 = vpack.c.b16 %v1342, %v1338
    %v1607 = vpack.c.b16 %v1343, %v1339
    %v1608 = vpack.c.b16 %v1344, %v1340
    %v1609 = vpack.c.b16 %v1345, %v1341
    %v1610 = vpack.c.b16 %v1350, %v1346
    %v1611 = vpack.c.b16 %v1351, %v1347
    %v1612 = vpack.c.b16 %v1352, %v1348
    %v1613 = vpack.c.b16 %v1353, %v1349
    %v1614 = vpack.c.b16 %v1358, %v1354
    %v1615 = vpack.c.b16 %v1359, %v1355
    %v1616 = vpack.c.b16 %v1360, %v1356
    %v1617 = vpack.c.b16 %v1361, %v1357
    %1874 = vmatpush.bf16.msra.mxu0 %v1390
    %1875 = vmatpush.bf16.msra.mxu0 %v1386
    %1876 = vmatpush.bf16.msra.mxu0 %v1382
    %1877 = vmatpush.bf16.msra.mxu0 %v1378
    %1878 = vmatpush.bf16.msra.mxu0 %v1374
    %1879 = vmatpush.bf16.msra.mxu0 %v1370
    %1880 = vmatpush.bf16.msra.mxu0 %v1366
    %1881 = vmatpush.bf16.msra.mxu0 %v1362
    %1882 = vmatmul.bf16.gmra.mxu0 %v326
    %v1883 = vpop.f32.mrf.mxu0
    %v1884 = vadd.f32 %v590, %v1883
    %v1885 = vpop.f32.mrf.mxu0
    %1886 = vdwg.mxu0
    %1887 = vmatpush.bf16.msra.mxu0 %v1422
    %1888 = vmatpush.bf16.msra.mxu0 %v1418
    %1889 = vmatpush.bf16.msra.mxu0 %v1414
    %1890 = vmatpush.bf16.msra.mxu0 %v1410
    %1891 = vmatpush.bf16.msra.mxu0 %v1406
    %1892 = vmatpush.bf16.msra.mxu0 %v1402
    %1893 = vmatpush.bf16.msra.mxu0 %v1398
    %1894 = vmatpush.bf16.msra.mxu0 %v1394
    %1895 = vmatmul.bf16.gmra.mxu0 %v327
    %v1896 = vpop.f32.mrf.mxu0
    %v1897 = vadd.f32 %v1884, %v1896
    %v1898 = vpop.f32.mrf.mxu0
    %1899 = vdwg.mxu0
    %1900 = vmatpush.bf16.msra.mxu0 %v1454
    %1901 = vmatpush.bf16.msra.mxu0 %v1450
    %1902 = vmatpush.bf16.msra.mxu0 %v1446
    %1903 = vmatpush.bf16.msra.mxu0 %v1442
    %1904 = vmatpush.bf16.msra.mxu0 %v1438
    %1905 = vmatpush.bf16.msra.mxu0 %v1434
    %1906 = vmatpush.bf16.msra.mxu0 %v1430
    %1907 = vmatpush.bf16.msra.mxu0 %v1426
    %1908 = vmatmul.bf16.gmra.mxu0 %v328
    %v1909 = vpop.f32.mrf.mxu0
    %v1910 = vadd.f32 %v1897, %v1909
    %v1911 = vpop.f32.mrf.mxu0
    %1912 = vdwg.mxu0
    %1913 = vmatpush.bf16.msra.mxu0 %v1486
    %1914 = vmatpush.bf16.msra.mxu0 %v1482
    %1915 = vmatpush.bf16.msra.mxu0 %v1478
    %1916 = vmatpush.bf16.msra.mxu0 %v1474
    %1917 = vmatpush.bf16.msra.mxu0 %v1470
    %1918 = vmatpush.bf16.msra.mxu0 %v1466
    %1919 = vmatpush.bf16.msra.mxu0 %v1462
    %1920 = vmatpush.bf16.msra.mxu0 %v1458
    %1921 = vmatmul.bf16.gmra.mxu0 %v329
    %v1922 = vpop.f32.mrf.mxu0
    %v1923 = vadd.f32 %v1910, %v1922
    %v1924 = vpop.f32.mrf.mxu0
    %1925 = vdwg.mxu0
    %1926 = vmatpush.bf16.msra.mxu0 %v1518
    %1927 = vmatpush.bf16.msra.mxu0 %v1514
    %1928 = vmatpush.bf16.msra.mxu0 %v1510
    %1929 = vmatpush.bf16.msra.mxu0 %v1506
    %1930 = vmatpush.bf16.msra.mxu0 %v1502
    %1931 = vmatpush.bf16.msra.mxu0 %v1498
    %1932 = vmatpush.bf16.msra.mxu0 %v1494
    %1933 = vmatpush.bf16.msra.mxu0 %v1490
    %1934 = vmatmul.bf16.gmra.mxu0 %v330
    %v1935 = vpop.f32.mrf.mxu0
    %v1936 = vadd.f32 %v1923, %v1935
    %v1937 = vpop.f32.mrf.mxu0
    %1938 = vdwg.mxu0
    %1939 = vmatpush.bf16.msra.mxu0 %v1550
    %1940 = vmatpush.bf16.msra.mxu0 %v1546
    %1941 = vmatpush.bf16.msra.mxu0 %v1542
    %1942 = vmatpush.bf16.msra.mxu0 %v1538
    %1943 = vmatpush.bf16.msra.mxu0 %v1534
    %1944 = vmatpush.bf16.msra.mxu0 %v1530
    %1945 = vmatpush.bf16.msra.mxu0 %v1526
    %1946 = vmatpush.bf16.msra.mxu0 %v1522
    %1947 = vmatmul.bf16.gmra.mxu0 %v331
    %v1948 = vpop.f32.mrf.mxu0
    %v1949 = vadd.f32 %v1936, %v1948
    %v1950 = vpop.f32.mrf.mxu0
    %1951 = vdwg.mxu0
    %1952 = vmatpush.bf16.msra.mxu0 %v1582
    %1953 = vmatpush.bf16.msra.mxu0 %v1578
    %1954 = vmatpush.bf16.msra.mxu0 %v1574
    %1955 = vmatpush.bf16.msra.mxu0 %v1570
    %1956 = vmatpush.bf16.msra.mxu0 %v1566
    %1957 = vmatpush.bf16.msra.mxu0 %v1562
    %1958 = vmatpush.bf16.msra.mxu0 %v1558
    %1959 = vmatpush.bf16.msra.mxu0 %v1554
    %1960 = vmatmul.bf16.gmra.mxu0 %v332
    %v1961 = vpop.f32.mrf.mxu0
    %v1962 = vadd.f32 %v1949, %v1961
    %v1963 = vpop.f32.mrf.mxu0
    %1964 = vdwg.mxu0
    %1965 = vmatpush.bf16.msra.mxu0 %v1614
    %1966 = vmatpush.bf16.msra.mxu0 %v1610
    %1967 = vmatpush.bf16.msra.mxu0 %v1606
    %1968 = vmatpush.bf16.msra.mxu0 %v1602
    %1969 = vmatpush.bf16.msra.mxu0 %v1598
    %1970 = vmatpush.bf16.msra.mxu0 %v1594
    %1971 = vmatpush.bf16.msra.mxu0 %v1590
    %1972 = vmatpush.bf16.msra.mxu0 %v1586
    %1973 = vmatmul.bf16.gmra.mxu0 %v333
    %v1974 = vpop.f32.mrf.mxu0
    %v1975 = vadd.f32 %v1962, %v1974
    %v1976 = vpop.f32.mrf.mxu0
    %1977 = vdwg.mxu0
    %1978 = vmatpush.bf16.msra.mxu0 %v1391
    %1979 = vmatpush.bf16.msra.mxu0 %v1387
    %1980 = vmatpush.bf16.msra.mxu0 %v1383
    %1981 = vmatpush.bf16.msra.mxu0 %v1379
    %1982 = vmatpush.bf16.msra.mxu0 %v1375
    %1983 = vmatpush.bf16.msra.mxu0 %v1371
    %1984 = vmatpush.bf16.msra.mxu0 %v1367
    %1985 = vmatpush.bf16.msra.mxu0 %v1363
    %1986 = vmatmul.bf16.gmra.mxu0 %v326
    %v1987 = vpop.f32.mrf.mxu0
    %v1988 = vadd.f32 %v591, %v1987
    %v1989 = vpop.f32.mrf.mxu0
    %1990 = vdwg.mxu0
    %1991 = vmatpush.bf16.msra.mxu0 %v1423
    %1992 = vmatpush.bf16.msra.mxu0 %v1419
    %1993 = vmatpush.bf16.msra.mxu0 %v1415
    %1994 = vmatpush.bf16.msra.mxu0 %v1411
    %1995 = vmatpush.bf16.msra.mxu0 %v1407
    %1996 = vmatpush.bf16.msra.mxu0 %v1403
    %1997 = vmatpush.bf16.msra.mxu0 %v1399
    %1998 = vmatpush.bf16.msra.mxu0 %v1395
    %1999 = vmatmul.bf16.gmra.mxu0 %v327
    %v2000 = vpop.f32.mrf.mxu0
    %v2001 = vadd.f32 %v1988, %v2000
    %v2002 = vpop.f32.mrf.mxu0
    %2003 = vdwg.mxu0
    %2004 = vmatpush.bf16.msra.mxu0 %v1455
    %2005 = vmatpush.bf16.msra.mxu0 %v1451
    %2006 = vmatpush.bf16.msra.mxu0 %v1447
    %2007 = vmatpush.bf16.msra.mxu0 %v1443
    %2008 = vmatpush.bf16.msra.mxu0 %v1439
    %2009 = vmatpush.bf16.msra.mxu0 %v1435
    %2010 = vmatpush.bf16.msra.mxu0 %v1431
    %2011 = vmatpush.bf16.msra.mxu0 %v1427
    %2012 = vmatmul.bf16.gmra.mxu0 %v328
    %v2013 = vpop.f32.mrf.mxu0
    %v2014 = vadd.f32 %v2001, %v2013
    %v2015 = vpop.f32.mrf.mxu0
    %2016 = vdwg.mxu0
    %2017 = vmatpush.bf16.msra.mxu0 %v1487
    %2018 = vmatpush.bf16.msra.mxu0 %v1483
    %2019 = vmatpush.bf16.msra.mxu0 %v1479
    %2020 = vmatpush.bf16.msra.mxu0 %v1475
    %2021 = vmatpush.bf16.msra.mxu0 %v1471
    %2022 = vmatpush.bf16.msra.mxu0 %v1467
    %2023 = vmatpush.bf16.msra.mxu0 %v1463
    %2024 = vmatpush.bf16.msra.mxu0 %v1459
    %2025 = vmatmul.bf16.gmra.mxu0 %v329
    %v2026 = vpop.f32.mrf.mxu0
    %v2027 = vadd.f32 %v2014, %v2026
    %v2028 = vpop.f32.mrf.mxu0
    %2029 = vdwg.mxu0
    %2030 = vmatpush.bf16.msra.mxu0 %v1519
    %2031 = vmatpush.bf16.msra.mxu0 %v1515
    %2032 = vmatpush.bf16.msra.mxu0 %v1511
    %2033 = vmatpush.bf16.msra.mxu0 %v1507
    %2034 = vmatpush.bf16.msra.mxu0 %v1503
    %2035 = vmatpush.bf16.msra.mxu0 %v1499
    %2036 = vmatpush.bf16.msra.mxu0 %v1495
    %2037 = vmatpush.bf16.msra.mxu0 %v1491
    %2038 = vmatmul.bf16.gmra.mxu0 %v330
    %v2039 = vpop.f32.mrf.mxu0
    %v2040 = vadd.f32 %v2027, %v2039
    %v2041 = vpop.f32.mrf.mxu0
    %2042 = vdwg.mxu0
    %2043 = vmatpush.bf16.msra.mxu0 %v1551
    %2044 = vmatpush.bf16.msra.mxu0 %v1547
    %2045 = vmatpush.bf16.msra.mxu0 %v1543
    %2046 = vmatpush.bf16.msra.mxu0 %v1539
    %2047 = vmatpush.bf16.msra.mxu0 %v1535
    %2048 = vmatpush.bf16.msra.mxu0 %v1531
    %2049 = vmatpush.bf16.msra.mxu0 %v1527
    %2050 = vmatpush.bf16.msra.mxu0 %v1523
    %2051 = vmatmul.bf16.gmra.mxu0 %v331
    %v2052 = vpop.f32.mrf.mxu0
    %v2053 = vadd.f32 %v2040, %v2052
    %v2054 = vpop.f32.mrf.mxu0
    %2055 = vdwg.mxu0
    %2056 = vmatpush.bf16.msra.mxu0 %v1583
    %2057 = vmatpush.bf16.msra.mxu0 %v1579
    %2058 = vmatpush.bf16.msra.mxu0 %v1575
    %2059 = vmatpush.bf16.msra.mxu0 %v1571
    %2060 = vmatpush.bf16.msra.mxu0 %v1567
    %2061 = vmatpush.bf16.msra.mxu0 %v1563
    %2062 = vmatpush.bf16.msra.mxu0 %v1559
    %2063 = vmatpush.bf16.msra.mxu0 %v1555
    %2064 = vmatmul.bf16.gmra.mxu0 %v332
    %v2065 = vpop.f32.mrf.mxu0
    %v2066 = vadd.f32 %v2053, %v2065
    %v2067 = vpop.f32.mrf.mxu0
    %2068 = vdwg.mxu0
    %2069 = vmatpush.bf16.msra.mxu0 %v1615
    %2070 = vmatpush.bf16.msra.mxu0 %v1611
    %2071 = vmatpush.bf16.msra.mxu0 %v1607
    %2072 = vmatpush.bf16.msra.mxu0 %v1603
    %2073 = vmatpush.bf16.msra.mxu0 %v1599
    %2074 = vmatpush.bf16.msra.mxu0 %v1595
    %2075 = vmatpush.bf16.msra.mxu0 %v1591
    %2076 = vmatpush.bf16.msra.mxu0 %v1587
    %2077 = vmatmul.bf16.gmra.mxu0 %v333
    %v2078 = vpop.f32.mrf.mxu0
    %v2079 = vadd.f32 %v2066, %v2078
    %v2080 = vpop.f32.mrf.mxu0
    %2081 = vdwg.mxu0
    %2082 = vmatpush.bf16.msra.mxu0 %v1392
    %2083 = vmatpush.bf16.msra.mxu0 %v1388
    %2084 = vmatpush.bf16.msra.mxu0 %v1384
    %2085 = vmatpush.bf16.msra.mxu0 %v1380
    %2086 = vmatpush.bf16.msra.mxu0 %v1376
    %2087 = vmatpush.bf16.msra.mxu0 %v1372
    %2088 = vmatpush.bf16.msra.mxu0 %v1368
    %2089 = vmatpush.bf16.msra.mxu0 %v1364
    %2090 = vmatmul.bf16.gmra.mxu0 %v326
    %v2091 = vpop.f32.mrf.mxu0
    %v2092 = vadd.f32 %v592, %v2091
    %v2093 = vpop.f32.mrf.mxu0
    %2094 = vdwg.mxu0
    %2095 = vmatpush.bf16.msra.mxu0 %v1424
    %2096 = vmatpush.bf16.msra.mxu0 %v1420
    %2097 = vmatpush.bf16.msra.mxu0 %v1416
    %2098 = vmatpush.bf16.msra.mxu0 %v1412
    %2099 = vmatpush.bf16.msra.mxu0 %v1408
    %2100 = vmatpush.bf16.msra.mxu0 %v1404
    %2101 = vmatpush.bf16.msra.mxu0 %v1400
    %2102 = vmatpush.bf16.msra.mxu0 %v1396
    %2103 = vmatmul.bf16.gmra.mxu0 %v327
    %v2104 = vpop.f32.mrf.mxu0
    %v2105 = vadd.f32 %v2092, %v2104
    %v2106 = vpop.f32.mrf.mxu0
    %2107 = vdwg.mxu0
    %2108 = vmatpush.bf16.msra.mxu0 %v1456
    %2109 = vmatpush.bf16.msra.mxu0 %v1452
    %2110 = vmatpush.bf16.msra.mxu0 %v1448
    %2111 = vmatpush.bf16.msra.mxu0 %v1444
    %2112 = vmatpush.bf16.msra.mxu0 %v1440
    %2113 = vmatpush.bf16.msra.mxu0 %v1436
    %2114 = vmatpush.bf16.msra.mxu0 %v1432
    %2115 = vmatpush.bf16.msra.mxu0 %v1428
    %2116 = vmatmul.bf16.gmra.mxu0 %v328
    %v2117 = vpop.f32.mrf.mxu0
    %v2118 = vadd.f32 %v2105, %v2117
    %v2119 = vpop.f32.mrf.mxu0
    %2120 = vdwg.mxu0
    %2121 = vmatpush.bf16.msra.mxu0 %v1488
    %2122 = vmatpush.bf16.msra.mxu0 %v1484
    %2123 = vmatpush.bf16.msra.mxu0 %v1480
    %2124 = vmatpush.bf16.msra.mxu0 %v1476
    %2125 = vmatpush.bf16.msra.mxu0 %v1472
    %2126 = vmatpush.bf16.msra.mxu0 %v1468
    %2127 = vmatpush.bf16.msra.mxu0 %v1464
    %2128 = vmatpush.bf16.msra.mxu0 %v1460
    %2129 = vmatmul.bf16.gmra.mxu0 %v329
    %v2130 = vpop.f32.mrf.mxu0
    %v2131 = vadd.f32 %v2118, %v2130
    %v2132 = vpop.f32.mrf.mxu0
    %2133 = vdwg.mxu0
    %2134 = vmatpush.bf16.msra.mxu0 %v1520
    %2135 = vmatpush.bf16.msra.mxu0 %v1516
    %2136 = vmatpush.bf16.msra.mxu0 %v1512
    %2137 = vmatpush.bf16.msra.mxu0 %v1508
    %2138 = vmatpush.bf16.msra.mxu0 %v1504
    %2139 = vmatpush.bf16.msra.mxu0 %v1500
    %2140 = vmatpush.bf16.msra.mxu0 %v1496
    %2141 = vmatpush.bf16.msra.mxu0 %v1492
    %2142 = vmatmul.bf16.gmra.mxu0 %v330
    %v2143 = vpop.f32.mrf.mxu0
    %v2144 = vadd.f32 %v2131, %v2143
    %v2145 = vpop.f32.mrf.mxu0
    %2146 = vdwg.mxu0
    %2147 = vmatpush.bf16.msra.mxu0 %v1552
    %2148 = vmatpush.bf16.msra.mxu0 %v1548
    %2149 = vmatpush.bf16.msra.mxu0 %v1544
    %2150 = vmatpush.bf16.msra.mxu0 %v1540
    %2151 = vmatpush.bf16.msra.mxu0 %v1536
    %2152 = vmatpush.bf16.msra.mxu0 %v1532
    %2153 = vmatpush.bf16.msra.mxu0 %v1528
    %2154 = vmatpush.bf16.msra.mxu0 %v1524
    %2155 = vmatmul.bf16.gmra.mxu0 %v331
    %v2156 = vpop.f32.mrf.mxu0
    %v2157 = vadd.f32 %v2144, %v2156
    %v2158 = vpop.f32.mrf.mxu0
    %2159 = vdwg.mxu0
    %2160 = vmatpush.bf16.msra.mxu0 %v1584
    %2161 = vmatpush.bf16.msra.mxu0 %v1580
    %2162 = vmatpush.bf16.msra.mxu0 %v1576
    %2163 = vmatpush.bf16.msra.mxu0 %v1572
    %2164 = vmatpush.bf16.msra.mxu0 %v1568
    %2165 = vmatpush.bf16.msra.mxu0 %v1564
    %2166 = vmatpush.bf16.msra.mxu0 %v1560
    %2167 = vmatpush.bf16.msra.mxu0 %v1556
    %2168 = vmatmul.bf16.gmra.mxu0 %v332
    %v2169 = vpop.f32.mrf.mxu0
    %v2170 = vadd.f32 %v2157, %v2169
    %v2171 = vpop.f32.mrf.mxu0
    %2172 = vdwg.mxu0
    %2173 = vmatpush.bf16.msra.mxu0 %v1616
    %2174 = vmatpush.bf16.msra.mxu0 %v1612
    %2175 = vmatpush.bf16.msra.mxu0 %v1608
    %2176 = vmatpush.bf16.msra.mxu0 %v1604
    %2177 = vmatpush.bf16.msra.mxu0 %v1600
    %2178 = vmatpush.bf16.msra.mxu0 %v1596
    %2179 = vmatpush.bf16.msra.mxu0 %v1592
    %2180 = vmatpush.bf16.msra.mxu0 %v1588
    %2181 = vmatmul.bf16.gmra.mxu0 %v333
    %v2182 = vpop.f32.mrf.mxu0
    %v2183 = vadd.f32 %v2170, %v2182
    %v2184 = vpop.f32.mrf.mxu0
    %2185 = vdwg.mxu0
    %2186 = vmatpush.bf16.msra.mxu0 %v1393
    %2187 = vmatpush.bf16.msra.mxu0 %v1389
    %2188 = vmatpush.bf16.msra.mxu0 %v1385
    %2189 = vmatpush.bf16.msra.mxu0 %v1381
    %2190 = vmatpush.bf16.msra.mxu0 %v1377
    %2191 = vmatpush.bf16.msra.mxu0 %v1373
    %2192 = vmatpush.bf16.msra.mxu0 %v1369
    %2193 = vmatpush.bf16.msra.mxu0 %v1365
    %2194 = vmatmul.bf16.gmra.mxu0 %v326
    %v2195 = vpop.f32.mrf.mxu0
    %v2196 = vadd.f32 %v593, %v2195
    %v2197 = vpop.f32.mrf.mxu0
    %2198 = vdwg.mxu0
    %2199 = vmatpush.bf16.msra.mxu0 %v1425
    %2200 = vmatpush.bf16.msra.mxu0 %v1421
    %2201 = vmatpush.bf16.msra.mxu0 %v1417
    %2202 = vmatpush.bf16.msra.mxu0 %v1413
    %2203 = vmatpush.bf16.msra.mxu0 %v1409
    %2204 = vmatpush.bf16.msra.mxu0 %v1405
    %2205 = vmatpush.bf16.msra.mxu0 %v1401
    %2206 = vmatpush.bf16.msra.mxu0 %v1397
    %2207 = vmatmul.bf16.gmra.mxu0 %v327
    %v2208 = vpop.f32.mrf.mxu0
    %v2209 = vadd.f32 %v2196, %v2208
    %v2210 = vpop.f32.mrf.mxu0
    %2211 = vdwg.mxu0
    %2212 = vmatpush.bf16.msra.mxu0 %v1457
    %2213 = vmatpush.bf16.msra.mxu0 %v1453
    %2214 = vmatpush.bf16.msra.mxu0 %v1449
    %2215 = vmatpush.bf16.msra.mxu0 %v1445
    %2216 = vmatpush.bf16.msra.mxu0 %v1441
    %2217 = vmatpush.bf16.msra.mxu0 %v1437
    %2218 = vmatpush.bf16.msra.mxu0 %v1433
    %2219 = vmatpush.bf16.msra.mxu0 %v1429
    %2220 = vmatmul.bf16.gmra.mxu0 %v328
    %v2221 = vpop.f32.mrf.mxu0
    %v2222 = vadd.f32 %v2209, %v2221
    %v2223 = vpop.f32.mrf.mxu0
    %2224 = vdwg.mxu0
    %2225 = vmatpush.bf16.msra.mxu0 %v1489
    %2226 = vmatpush.bf16.msra.mxu0 %v1485
    %2227 = vmatpush.bf16.msra.mxu0 %v1481
    %2228 = vmatpush.bf16.msra.mxu0 %v1477
    %2229 = vmatpush.bf16.msra.mxu0 %v1473
    %2230 = vmatpush.bf16.msra.mxu0 %v1469
    %2231 = vmatpush.bf16.msra.mxu0 %v1465
    %2232 = vmatpush.bf16.msra.mxu0 %v1461
    %2233 = vmatmul.bf16.gmra.mxu0 %v329
    %v2234 = vpop.f32.mrf.mxu0
    %v2235 = vadd.f32 %v2222, %v2234
    %v2236 = vpop.f32.mrf.mxu0
    %2237 = vdwg.mxu0
    %2238 = vmatpush.bf16.msra.mxu0 %v1521
    %2239 = vmatpush.bf16.msra.mxu0 %v1517
    %2240 = vmatpush.bf16.msra.mxu0 %v1513
    %2241 = vmatpush.bf16.msra.mxu0 %v1509
    %2242 = vmatpush.bf16.msra.mxu0 %v1505
    %2243 = vmatpush.bf16.msra.mxu0 %v1501
    %2244 = vmatpush.bf16.msra.mxu0 %v1497
    %2245 = vmatpush.bf16.msra.mxu0 %v1493
    %2246 = vmatmul.bf16.gmra.mxu0 %v330
    %v2247 = vpop.f32.mrf.mxu0
    %v2248 = vadd.f32 %v2235, %v2247
    %v2249 = vpop.f32.mrf.mxu0
    %2250 = vdwg.mxu0
    %2251 = vmatpush.bf16.msra.mxu0 %v1553
    %2252 = vmatpush.bf16.msra.mxu0 %v1549
    %2253 = vmatpush.bf16.msra.mxu0 %v1545
    %2254 = vmatpush.bf16.msra.mxu0 %v1541
    %2255 = vmatpush.bf16.msra.mxu0 %v1537
    %2256 = vmatpush.bf16.msra.mxu0 %v1533
    %2257 = vmatpush.bf16.msra.mxu0 %v1529
    %2258 = vmatpush.bf16.msra.mxu0 %v1525
    %2259 = vmatmul.bf16.gmra.mxu0 %v331
    %v2260 = vpop.f32.mrf.mxu0
    %v2261 = vadd.f32 %v2248, %v2260
    %v2262 = vpop.f32.mrf.mxu0
    %2263 = vdwg.mxu0
    %2264 = vmatpush.bf16.msra.mxu0 %v1585
    %2265 = vmatpush.bf16.msra.mxu0 %v1581
    %2266 = vmatpush.bf16.msra.mxu0 %v1577
    %2267 = vmatpush.bf16.msra.mxu0 %v1573
    %2268 = vmatpush.bf16.msra.mxu0 %v1569
    %2269 = vmatpush.bf16.msra.mxu0 %v1565
    %2270 = vmatpush.bf16.msra.mxu0 %v1561
    %2271 = vmatpush.bf16.msra.mxu0 %v1557
    %2272 = vmatmul.bf16.gmra.mxu0 %v332
    %v2273 = vpop.f32.mrf.mxu0
    %v2274 = vadd.f32 %v2261, %v2273
    %v2275 = vpop.f32.mrf.mxu0
    %2276 = vdwg.mxu0
    %2277 = vmatpush.bf16.msra.mxu0 %v1617
    %2278 = vmatpush.bf16.msra.mxu0 %v1613
    %2279 = vmatpush.bf16.msra.mxu0 %v1609
    %2280 = vmatpush.bf16.msra.mxu0 %v1605
    %2281 = vmatpush.bf16.msra.mxu0 %v1601
    %2282 = vmatpush.bf16.msra.mxu0 %v1597
    %2283 = vmatpush.bf16.msra.mxu0 %v1593
    %2284 = vmatpush.bf16.msra.mxu0 %v1589
    %2285 = vmatmul.bf16.gmra.mxu0 %v333
    %v2286 = vpop.f32.mrf.mxu0
    %v2287 = vadd.f32 %v2274, %v2286
    %v2288 = vpop.f32.mrf.mxu0
    %2289 = vdwg.mxu0
    %v2290 = vmax.f32 %v1975, 0.0
    %v2291 = vmax.f32 %v2079, 0.0
    %v2292 = vmax.f32 %v2183, 0.0
    %v2293 = vmax.f32 %v2287, 0.0
    %v2294 = vpack.c.bf16 %v2290, %v2290
    %v2295 = vpack.c.bf16 %v2291, %v2291
    %v2296 = vpack.c.bf16 %v2292, %v2292
    %v2297 = vpack.c.bf16 %v2293, %v2293
    %v2298 = vld [vmem:[#allocation4] sm:$0xf]
    %v2299 = vld [vmem:[#allocation4 + $0x4] sm:$0xf]
    %v2300 = vld [vmem:[#allocation4 + $0x8] sm:$0xf]
    %v2301 = vld [vmem:[#allocation4 + $0xc] sm:$0xf]
    %v2302 = vld [vmem:[#allocation4 + $0x10] sm:$0xf]
    %v2303 = vld [vmem:[#allocation4 + $0x14] sm:$0xf]
    %v2304 = vld [vmem:[#allocation4 + $0x18] sm:$0xf]
    %v2305 = vld [vmem:[#allocation4 + $0x1c] sm:$0xf]
    %v2306 = vld [vmem:[#allocation4 + $0x20] sm:$0xf]
    %v2307 = vld [vmem:[#allocation4 + $0x24] sm:$0xf]
    %v2308 = vld [vmem:[#allocation4 + $0x28] sm:$0xf]
    %v2309 = vld [vmem:[#allocation4 + $0x2c] sm:$0xf]
    %v2310 = vld [vmem:[#allocation4 + $0x30] sm:$0xf]
    %v2311 = vld [vmem:[#allocation4 + $0x34] sm:$0xf]
    %v2312 = vld [vmem:[#allocation4 + $0x38] sm:$0xf]
    %v2313 = vld [vmem:[#allocation4 + $0x3c] sm:$0xf]
    %v2314 = vld [vmem:[#allocation4 + $0x40] sm:$0xf]
    %v2315 = vld [vmem:[#allocation4 + $0x44] sm:$0xf]
    %v2316 = vld [vmem:[#allocation4 + $0x48] sm:$0xf]
    %v2317 = vld [vmem:[#allocation4 + $0x4c] sm:$0xf]
    %v2318 = vld [vmem:[#allocation4 + $0x50] sm:$0xf]
    %v2319 = vld [vmem:[#allocation4 + $0x54] sm:$0xf]
    %v2320 = vld [vmem:[#allocation4 + $0x58] sm:$0xf]
    %v2321 = vld [vmem:[#allocation4 + $0x5c] sm:$0xf]
    %v2322 = vld [vmem:[#allocation4 + $0x60] sm:$0xf]
    %v2323 = vld [vmem:[#allocation4 + $0x64] sm:$0xf]
    %v2324 = vld [vmem:[#allocation4 + $0x68] sm:$0xf]
    %v2325 = vld [vmem:[#allocation4 + $0x6c] sm:$0xf]
    %v2326 = vld [vmem:[#allocation4 + $0x70] sm:$0xf]
    %v2327 = vld [vmem:[#allocation4 + $0x74] sm:$0xf]
    %v2328 = vld [vmem:[#allocation4 + $0x78] sm:$0xf]
    %v2329 = vld [vmem:[#allocation4 + $0x7c] sm:$0xf]
    %v2330 = vld [vmem:[#allocation4 + $0x80] sm:$0xf]
    %v2331 = vld [vmem:[#allocation4 + $0x84] sm:$0xf]
    %v2332 = vld [vmem:[#allocation4 + $0x88] sm:$0xf]
    %v2333 = vld [vmem:[#allocation4 + $0x8c] sm:$0xf]
    %v2334 = vld [vmem:[#allocation4 + $0x90] sm:$0xf]
    %v2335 = vld [vmem:[#allocation4 + $0x94] sm:$0xf]
    %v2336 = vld [vmem:[#allocation4 + $0x98] sm:$0xf]
    %v2337 = vld [vmem:[#allocation4 + $0x9c] sm:$0xf]
    %v2338 = vld [vmem:[#allocation4 + $0xa0] sm:$0xf]
    %v2339 = vld [vmem:[#allocation4 + $0xa4] sm:$0xf]
    %v2340 = vld [vmem:[#allocation4 + $0xa8] sm:$0xf]
    %v2341 = vld [vmem:[#allocation4 + $0xac] sm:$0xf]
    %v2342 = vld [vmem:[#allocation4 + $0xb0] sm:$0xf]
    %v2343 = vld [vmem:[#allocation4 + $0xb4] sm:$0xf]
    %v2344 = vld [vmem:[#allocation4 + $0xb8] sm:$0xf]
    %v2345 = vld [vmem:[#allocation4 + $0xbc] sm:$0xf]
    %v2346 = vld [vmem:[#allocation4 + $0xc0] sm:$0xf]
    %v2347 = vld [vmem:[#allocation4 + $0xc4] sm:$0xf]
    %v2348 = vld [vmem:[#allocation4 + $0xc8] sm:$0xf]
    %v2349 = vld [vmem:[#allocation4 + $0xcc] sm:$0xf]
    %v2350 = vld [vmem:[#allocation4 + $0xd0] sm:$0xf]
    %v2351 = vld [vmem:[#allocation4 + $0xd4] sm:$0xf]
    %v2352 = vld [vmem:[#allocation4 + $0xd8] sm:$0xf]
    %v2353 = vld [vmem:[#allocation4 + $0xdc] sm:$0xf]
    %v2354 = vld [vmem:[#allocation4 + $0xe0] sm:$0xf]
    %v2355 = vld [vmem:[#allocation4 + $0xe4] sm:$0xf]
    %v2356 = vld [vmem:[#allocation4 + $0xe8] sm:$0xf]
    %v2357 = vld [vmem:[#allocation4 + $0xec] sm:$0xf]
    %v2358 = vld [vmem:[#allocation4 + $0xf0] sm:$0xf]
    %v2359 = vld [vmem:[#allocation4 + $0xf4] sm:$0xf]
    %v2360 = vld [vmem:[#allocation4 + $0xf8] sm:$0xf]
    %v2361 = vld [vmem:[#allocation4 + $0xfc] sm:$0xf]
    %v2362 = vperm.slane %v74, 2
    %v2427 = vunpack.c.l.b16 %v2298
    %v2428 = vunpack.c.l.b16 %v2299
    %v2429 = vunpack.c.l.b16 %v2300
    %v2430 = vunpack.c.l.b16 %v2301
    %v2431 = vunpack.c.l.b16 %v2302
    %v2432 = vunpack.c.l.b16 %v2303
    %v2433 = vunpack.c.l.b16 %v2304
    %v2434 = vunpack.c.l.b16 %v2305
    %v2435 = vunpack.c.l.b16 %v2306
    %v2436 = vunpack.c.l.b16 %v2307
    %v2437 = vunpack.c.l.b16 %v2308
    %v2438 = vunpack.c.l.b16 %v2309
    %v2439 = vunpack.c.l.b16 %v2310
    %v2440 = vunpack.c.l.b16 %v2311
    %v2441 = vunpack.c.l.b16 %v2312
    %v2442 = vunpack.c.l.b16 %v2313
    %v2443 = vunpack.c.l.b16 %v2314
    %v2444 = vunpack.c.l.b16 %v2315
    %v2445 = vunpack.c.l.b16 %v2316
    %v2446 = vunpack.c.l.b16 %v2317
    %v2447 = vunpack.c.l.b16 %v2318
    %v2448 = vunpack.c.l.b16 %v2319
    %v2449 = vunpack.c.l.b16 %v2320
    %v2450 = vunpack.c.l.b16 %v2321
    %v2451 = vunpack.c.l.b16 %v2322
    %v2452 = vunpack.c.l.b16 %v2323
    %v2453 = vunpack.c.l.b16 %v2324
    %v2454 = vunpack.c.l.b16 %v2325
    %v2455 = vunpack.c.l.b16 %v2326
    %v2456 = vunpack.c.l.b16 %v2327
    %v2457 = vunpack.c.l.b16 %v2328
    %v2458 = vunpack.c.l.b16 %v2329
    %v2459 = vunpack.c.l.b16 %v2330
    %v2460 = vunpack.c.l.b16 %v2331
    %v2461 = vunpack.c.l.b16 %v2332
    %v2462 = vunpack.c.l.b16 %v2333
    %v2463 = vunpack.c.l.b16 %v2334
    %v2464 = vunpack.c.l.b16 %v2335
    %v2465 = vunpack.c.l.b16 %v2336
    %v2466 = vunpack.c.l.b16 %v2337
    %v2467 = vunpack.c.l.b16 %v2338
    %v2468 = vunpack.c.l.b16 %v2339
    %v2469 = vunpack.c.l.b16 %v2340
    %v2470 = vunpack.c.l.b16 %v2341
    %v2471 = vunpack.c.l.b16 %v2342
    %v2472 = vunpack.c.l.b16 %v2343
    %v2473 = vunpack.c.l.b16 %v2344
    %v2474 = vunpack.c.l.b16 %v2345
    %v2475 = vunpack.c.l.b16 %v2346
    %v2476 = vunpack.c.l.b16 %v2347
    %v2477 = vunpack.c.l.b16 %v2348
    %v2478 = vunpack.c.l.b16 %v2349
    %v2479 = vunpack.c.l.b16 %v2350
    %v2480 = vunpack.c.l.b16 %v2351
    %v2481 = vunpack.c.l.b16 %v2352
    %v2482 = vunpack.c.l.b16 %v2353
    %v2483 = vunpack.c.l.b16 %v2354
    %v2484 = vunpack.c.l.b16 %v2355
    %v2485 = vunpack.c.l.b16 %v2356
    %v2486 = vunpack.c.l.b16 %v2357
    %v2487 = vunpack.c.l.b16 %v2358
    %v2488 = vunpack.c.l.b16 %v2359
    %v2489 = vunpack.c.l.b16 %v2360
    %v2490 = vunpack.c.l.b16 %v2361
    %v2491 = vpack.c.b16 %v2428, %v2427
    %v2492 = vpack.c.b16 %v2430, %v2429
    %v2493 = vpack.c.b16 %v2432, %v2431
    %v2494 = vpack.c.b16 %v2434, %v2433
    %v2495 = vpack.c.b16 %v2436, %v2435
    %v2496 = vpack.c.b16 %v2438, %v2437
    %v2497 = vpack.c.b16 %v2440, %v2439
    %v2498 = vpack.c.b16 %v2442, %v2441
    %v2499 = vpack.c.b16 %v2444, %v2443
    %v2500 = vpack.c.b16 %v2446, %v2445
    %v2501 = vpack.c.b16 %v2448, %v2447
    %v2502 = vpack.c.b16 %v2450, %v2449
    %v2503 = vpack.c.b16 %v2452, %v2451
    %v2504 = vpack.c.b16 %v2454, %v2453
    %v2505 = vpack.c.b16 %v2456, %v2455
    %v2506 = vpack.c.b16 %v2458, %v2457
    %v2507 = vpack.c.b16 %v2460, %v2459
    %v2508 = vpack.c.b16 %v2462, %v2461
    %v2509 = vpack.c.b16 %v2464, %v2463
    %v2510 = vpack.c.b16 %v2466, %v2465
    %v2511 = vpack.c.b16 %v2468, %v2467
    %v2512 = vpack.c.b16 %v2470, %v2469
    %v2513 = vpack.c.b16 %v2472, %v2471
    %v2514 = vpack.c.b16 %v2474, %v2473
    %v2515 = vpack.c.b16 %v2476, %v2475
    %v2516 = vpack.c.b16 %v2478, %v2477
    %v2517 = vpack.c.b16 %v2480, %v2479
    %v2518 = vpack.c.b16 %v2482, %v2481
    %v2519 = vpack.c.b16 %v2484, %v2483
    %v2520 = vpack.c.b16 %v2486, %v2485
    %v2521 = vpack.c.b16 %v2488, %v2487
    %v2522 = vpack.c.b16 %v2490, %v2489
    %2555 = vmatpush.bf16.msra.mxu0 %v2498
    %2556 = vmatpush.bf16.msra.mxu0 %v2497
    %2557 = vmatpush.bf16.msra.mxu0 %v2496
    %2558 = vmatpush.bf16.msra.mxu0 %v2495
    %2559 = vmatpush.bf16.msra.mxu0 %v2494
    %2560 = vmatpush.bf16.msra.mxu0 %v2493
    %2561 = vmatpush.bf16.msra.mxu0 %v2492
    %2562 = vmatpush.bf16.msra.mxu0 %v2491
    %2563 = vmatmul.bf16.gmra.mxu0 %v2294
    %v2564 = vpop.f32.mrf.mxu0
    %v2565 = vadd.f32 %v2362, %v2564
    %v2566 = vpop.f32.mrf.mxu0
    %2567 = vdwg.mxu0
    %2568 = vmatpush.bf16.msra.mxu0 %v2506
    %2569 = vmatpush.bf16.msra.mxu0 %v2505
    %2570 = vmatpush.bf16.msra.mxu0 %v2504
    %2571 = vmatpush.bf16.msra.mxu0 %v2503
    %2572 = vmatpush.bf16.msra.mxu0 %v2502
    %2573 = vmatpush.bf16.msra.mxu0 %v2501
    %2574 = vmatpush.bf16.msra.mxu0 %v2500
    %2575 = vmatpush.bf16.msra.mxu0 %v2499
    %2576 = vmatmul.bf16.gmra.mxu0 %v2295
    %v2577 = vpop.f32.mrf.mxu0
    %v2578 = vadd.f32 %v2565, %v2577
    %v2579 = vpop.f32.mrf.mxu0
    %2580 = vdwg.mxu0
    %2581 = vmatpush.bf16.msra.mxu0 %v2514
    %2582 = vmatpush.bf16.msra.mxu0 %v2513
    %2583 = vmatpush.bf16.msra.mxu0 %v2512
    %2584 = vmatpush.bf16.msra.mxu0 %v2511
    %2585 = vmatpush.bf16.msra.mxu0 %v2510
    %2586 = vmatpush.bf16.msra.mxu0 %v2509
    %2587 = vmatpush.bf16.msra.mxu0 %v2508
    %2588 = vmatpush.bf16.msra.mxu0 %v2507
    %2589 = vmatmul.bf16.gmra.mxu0 %v2296
    %v2590 = vpop.f32.mrf.mxu0
    %v2591 = vadd.f32 %v2578, %v2590
    %v2592 = vpop.f32.mrf.mxu0
    %2593 = vdwg.mxu0
    %2594 = vmatpush.bf16.msra.mxu0 %v2522
    %2595 = vmatpush.bf16.msra.mxu0 %v2521
    %2596 = vmatpush.bf16.msra.mxu0 %v2520
    %2597 = vmatpush.bf16.msra.mxu0 %v2519
    %2598 = vmatpush.bf16.msra.mxu0 %v2518
    %2599 = vmatpush.bf16.msra.mxu0 %v2517
    %2600 = vmatpush.bf16.msra.mxu0 %v2516
    %2601 = vmatpush.bf16.msra.mxu0 %v2515
    %2602 = vmatmul.bf16.gmra.mxu0 %v2297
    %v2603 = vpop.f32.mrf.mxu0
    %v2604 = vadd.f32 %v2591, %v2603
    %v2605 = vpop.f32.mrf.mxu0
    %2606 = vdwg.mxu0
    %v2607 = vlaneseq
    %v2608 = vand.u32 %v2607, 127
    %vm2609 = vcmp.eq.s32.totalorder %v2608, 9
    %v2610 = vtanh.pop %v2604
    %v2611 = vsel %vm2609, %v2610, %v2604
    %v2612 = vpack.c.bf16 %v2611, %v2611
    %2613 = vst [vmem:[%s6] sm:$0xf] %v2612
    // Predicated region
    $region34: #{network_forward_batched.1} parent=1 // pred_check
      _
    $region35: #{network_forward_batched.1} parent=1 // pred_check_branch
      %2615 = sbr.rel (0) target = $region37
    $region36: #{network_forward_batched.1} parent=1 // pred_region
      _
    $region37: #{network_forward_batched.1} parent=1 // pred_fallthru
      _
    // Predicated region
    $region38: #{network_forward_batched.1} parent=1 // pred_check
      _
    $region39: #{network_forward_batched.1} parent=1 // pred_check_branch
      %2617 = sbr.rel (0) target = $region41
    $region40: #{network_forward_batched.1} parent=1 // pred_region
      _
    $region41: #{network_forward_batched.1} parent=1 // pred_fallthru
      _
    %2618 = vsyncpa [#allocation3], 1
    %2619 = vsyncpa [#allocation5], 1

</llo_original>
